<compile_context>
chip_gen: v7x
topology: tpu7x:2x2x1
jax: 0.10.0
libtpu: 0.0.40
codegen_flags: <defaults>
</compile_context>

<pallas_src>
import functools

import numpy as np
import jax
import jax.numpy as jnp
from jax.experimental import pallas as pl
from jax.experimental.pallas import tpu as pltpu


# Feed the MXU bf16 operands (f32 accumulate) — review item for v6e/v7x.  Left
# off: the self-check tolerance is 5e-3 and the win is only material at much
# larger channel counts / frame lengths (this kernel is overhead bound here).
MXU_BF16 = False


def _round_up(x, m):
    return (x + m - 1) // m * m


def _nbytes(shape):
    return int(np.prod(shape)) * 4  # everything here is f32


# ----------------------------- Fused Pallas kernel ---------------------------

def _encoder_kernel(*args, n_conv, widths):
    """Whole encoder for one block of frames.

    Activation layout: one frame per sublane row, (position, channel) flattened
    onto lanes (position-major).  Every layer is a single MXU matmul + bias +
    ReLU; intermediate activations live in VMEM ping/pong scratch.
    """
    x_ref = args[0]
    conv_w = [args[1 + 2 * i] for i in range(n_conv)]      # (L_in*Cin, L_out*K)
    conv_b = [args[2 + 2 * i] for i in range(n_conv)]      # (1, L_out*K)
    wlin_ref = args[1 + 2 * n_conv]                        # (L_last*K, Epad)
    blin_ref = args[2 + 2 * n_conv]                        # (1, Epad)
    o_ref = args[3 + 2 * n_conv]                           # (nb, Epad)
    scr = (args[4 + 2 * n_conv], args[5 + 2 * n_conv])     # 2 x (nb, wmax)

    def _dot(lhs, w_ref):
        rhs = w_ref[...]
        if MXU_BF16:
            lhs = lhs.astype(jnp.bfloat16)
            rhs = rhs.astype(jnp.bfloat16)
        return jnp.dot(lhs, rhs, preferred_element_type=jnp.float32)

    src_ref, w_in = None, widths[0]
    for i in range(n_conv):
        lhs = x_ref[...] if i == 0 else src_ref[:, :w_in]
        acc = _dot(lhs, conv_w[i])                          # one MXU matmul / layer
        acc = jnp.maximum(acc + conv_b[i][...], 0.0)
        # TODO(synk): nn.Dropout is stochastic; identity here (eval-mode semantics).
        w_out = widths[i + 1]
        dst = scr[i % 2]
        dst[:, :w_out] = acc                                # park activation in VMEM
        src_ref, w_in = dst, w_out

    # Final linear collapsed into one lane-dense matmul (flatten order folded
    # into wlin by the wrapper; E zero-padded to 128 lanes -> unmasked store).
    out = _dot(src_ref[:, :w_in], wlin_ref) + blin_ref[...]
    o_ref[...] = out.astype(o_ref.dtype)


# --------------------- Conv1d -> dense matmul folding (wrapper) ---------------

def _fold_conv_to_matmul(w_kio, bias, l_in, l_out, stride, pad):
    """Fold a Conv1d (taps, zero padding, stride) into one dense matmul.

    Returns (W, b) with
        W[li*Cin + ci, lo*Cout + co] = w_kio[li - lo*stride + pad, ci, co]
    (zero where the tap index falls outside the kernel) and
        b[lo*Cout + co] = bias[co],
    so that for a frame x laid out as (L_in*Cin,) position-major/channel-minor,
    relu(x @ W + b) is the (L_out*Cout,) conv output in the same layout.
    """
    ks, cin, cout = w_kio.shape
    li = np.arange(l_in)[:, None]                  # (L_in, 1)
    lo = np.arange(l_out)[None, :]                 # (1, L_out)
    kk = li - lo * stride + pad                    # (L_in, L_out)
    valid = ((kk >= 0) & (kk < ks)).astype(np.float32)
    kk = np.clip(kk, 0, ks - 1).astype(np.int32)

    blocks = jnp.take(w_kio, jnp.asarray(kk.reshape(-1)), axis=0)
    blocks = blocks.reshape(l_in, l_out, cin, cout)
    blocks = blocks * jnp.asarray(valid)[:, :, None, None]
    w_mat = jnp.transpose(blocks, (0, 2, 1, 3)).reshape(l_in * cin, l_out * cout)
    b_vec = jnp.tile(bias, (l_out,))               # index = lo*Cout + co
    return w_mat, b_vec


# ------------------------------ Pallas wrapper --------------------------------

def _num_tensorcores():
    # The 2-way frame split only pays off on v7x (2 TensorCores per chip); on
    # single-TC v5e/v6e an extra grid step is pure overhead (review item).
    try:
        kind = jax.devices()[0].device_kind.lower()
    except Exception:  # pragma: no cover
        return 1
    return 2 if "v7" in kind else 1


def _fused_encoder(x2d, conv_mats, w_lin_pad, b_lin_pad, widths):
    """x2d: (N, L0*Cin) frames, lane order = position-major. Returns (N, Epad)."""
    n = x2d.shape[0]
    epad = w_lin_pad.shape[1]
    wmax = max(widths[1:])
    n_conv = len(conv_mats)

    # Split the frame axis over 2 "parallel" grid steps only when there are two
    # TensorCores to run them on (v7x); otherwise one step.
    if _num_tensorcores() >= 2 and n % 2 == 0 and (n // 2) % 8 == 0:
        nb = n // 2
    else:
        nb = n
    grid = (n // nb,)

    in_specs = [pl.BlockSpec((nb, widths[0]), lambda i: (i, 0))]
    operands = [x2d]
    for w_mat, b_vec in conv_mats:
        in_specs.append(pl.BlockSpec(w_mat.shape, lambda i: (0, 0)))
        in_specs.append(pl.BlockSpec((1, b_vec.shape[0]), lambda i: (0, 0)))
        operands.append(w_mat)
        operands.append(b_vec.reshape(1, -1))
    in_specs.append(pl.BlockSpec(w_lin_pad.shape, lambda i: (0, 0)))
    in_specs.append(pl.BlockSpec((1, epad), lambda i: (0, 0)))
    operands.extend([w_lin_pad, b_lin_pad.reshape(1, epad)])

    scratch = [pltpu.VMEM((nb, wmax), jnp.float32),
               pltpu.VMEM((nb, wmax), jnp.float32)]

    # Explicit VMEM budget (review item): double-buffered operand/output blocks
    # plus resident scratch, with headroom; refuse configs whose folded weights
    # would not fit comfortably (large frame_size belongs to a sliding-window
    # conv kernel instead).
    block_bytes = _nbytes((nb, widths[0]))
    for w_mat, b_vec in conv_mats:
        block_bytes += _nbytes(w_mat.shape) + _nbytes((1, b_vec.shape[0]))
    block_bytes += _nbytes(w_lin_pad.shape) + _nbytes((1, epad))
    out_bytes = _nbytes((nb, epad))
    scratch_bytes = 2 * _nbytes((nb, wmax))
    est = 2 * (block_bytes + out_bytes) + scratch_bytes
    if est > 48 * 1024 * 1024:
        raise ValueError(
            f"Folded encoder needs ~{est / 2**20:.1f} MiB of VMEM; this "
            "matmul-folded kernel targets small frame sizes.")
    vmem_limit = int(min(max(2 * est, 32 * 1024 * 1024), 60 * 1024 * 1024))

    kernel = functools.partial(_encoder_kernel, n_conv=n_conv,
                               widths=tuple(widths))

    return pl.pallas_call(
        kernel,
        out_shape=jax.ShapeDtypeStruct((n, epad), x2d.dtype),
        grid=grid,
        in_specs=in_specs,
        out_specs=pl.BlockSpec((nb, epad), lambda i: (i, 0)),
        scratch_shapes=scratch,
        compiler_params=pltpu.CompilerParams(
            dimension_semantics=("parallel",),
            vmem_limit_bytes=vmem_limit),
    )(*operands)


# ------------------------------ Model wrapper ---------------------------------

def init_params(key, cfg):
    convs = []
    cin = cfg["input_variables"]
    n_conv = cfg["num_conv_layers"] + 2  # in + hidden + out blocks
    for _ in range(n_conv):
        key, kw, kb = jax.random.split(key, 3)
        fan_in = cin * cfg["kernel_size"]
        w = jax.random.normal(
            kw, (cfg["kernel_size"], cin, cfg["num_kernels"]),
            jnp.float32) / jnp.sqrt(float(fan_in))
        b = jax.random.normal(kb, (cfg["num_kernels"],), jnp.float32) * 0.01
        convs.append((w, b))
        cin = cfg["num_kernels"]

    # Replicates the PyTorch __init__ dummy pass that infers the linear in_size.
    l = cfg["frame_size"]
    for _ in range(n_conv):
        l = (l + 2 * cfg["conv_padding"] - cfg["kernel_size"]) // cfg["stride"] + 1
    in_size = l * cfg["num_kernels"]

    key, kw, kb = jax.random.split(key, 3)
    w_lin = jax.random.normal(kw, (in_size, cfg["embedding_dim"]),
                              jnp.float32) / jnp.sqrt(float(in_size))
    b_lin = jax.random.normal(kb, (cfg["embedding_dim"],), jnp.float32) * 0.01
    return {"convs": convs, "linear": (w_lin, b_lin)}


def base_encoder_t_forward(params, x, cfg):
    """x: (B, num_variables, num_frames, frame_size) -> (B, num_frames, embedding_dim)."""
    b, v, f, t = x.shape
    e = cfg["embedding_dim"]
    kch = cfg["num_kernels"]
    stride = cfg["stride"]
    pad = cfg["conv_padding"]
    n_conv = len(params["convs"])

    # Static per-layer lengths (matches torch Conv1d output sizes).
    lens = [t]
    for _ in range(n_conv):
        lens.append((lens[-1] + 2 * pad - cfg["kernel_size"]) // stride + 1)
    l_last = lens[-1]

    # One frame per row; (position, channel) flattened onto lanes (pos-major):
    # (B,V,F,T) -> (B,F,T,V) -> (N, T*V).
    h = jnp.transpose(x, (0, 2, 3, 1)).reshape(b * f, t * v)

    # Fold every Conv1d (taps, zero padding, stride) into one dense matmul.
    conv_mats = []
    for li, (w_kio, bias) in enumerate(params["convs"]):
        conv_mats.append(_fold_conv_to_matmul(
            w_kio, bias, lens[li], lens[li + 1], stride, pad))

    # Final linear: fold torch's flatten order (K outer, L inner) into the
    # weight and zero-pad E (and its bias, with zeros) to 128 lanes.
    w_lin, b_lin = params["linear"]
    assert w_lin.shape[0] == l_last * kch
    w_fold = w_lin.reshape(kch, l_last, e).transpose(1, 0, 2).reshape(l_last * kch, e)
    epad = _round_up(e, 128)
    w_fold = jnp.pad(w_fold, ((0, 0), (0, epad - e)))
    b_pad = jnp.pad(b_lin, (0, epad - e))

    widths = [t * v] + [lens[i + 1] * kch for i in range(n_conv)]

    out = _fused_encoder(h, conv_mats, w_fold, b_pad, widths)   # (N, Epad)
    return out[:, :e].reshape(b, f, e)


# ------------------------------ Pure-JAX reference ----------------------------

def ref_forward(params, x, cfg):
    b, v, f, t = x.shape
    h = jnp.transpose(x, (0, 2, 1, 3)).reshape(b * f, v, t)   # (N, Cin, T)
    pad, s = cfg["conv_padding"], cfg["stride"]
    for w_kio, bias in params["convs"]:
        ks = w_kio.shape[0]
        hp = jnp.pad(h, ((0, 0), (0, 0), (pad, pad)))
        l_full = hp.shape[-1] - ks + 1
        cols = jnp.stack([hp[:, :, k:k + l_full] for k in range(ks)], axis=-1)
        out = jnp.einsum("nclk,kco->nol", cols, w_kio, precision="highest")
        out = jnp.maximum(out + bias[None, :, None], 0.0)
        h = out[:, :, ::s]
    n, k, l_out = h.shape
    h = h.reshape(n, k * l_out)                               # K outer, L inner
    w_lin, b_lin = params["linear"]
    out = jnp.dot(h, w_lin, precision="highest") + b_lin
    return out.reshape(b, f, cfg["embedding_dim"])


# ----------------------------------- Main --------------------------------------

if __name__ == "__main__":
    cfg = dict(
        input_variables=4,
        num_kernels=32,
        kernel_size=3,
        stride=1,
        num_conv_layers=1,
        conv_dropout=0.0,
        conv_padding=1,
        frame_size=16,
        embedding_dim=32,
    )
    batch, num_frames = 2, 8

    key = jax.random.PRNGKey(0)
    kx, kp = jax.random.split(key)
    x = jax.random.normal(
        kx, (batch, cfg["input_variables"], num_frames, cfg["frame_size"]),
        jnp.float32)
    params = init_params(kp, cfg)

    fwd = jax.jit(functools.partial(base_encoder_t_forward, cfg=cfg))
    out = jax.block_until_ready(fwd(params, x))

    assert out.shape == (batch, num_frames, cfg["embedding_dim"]), out.shape
    ref = ref_forward(params, x, cfg)
    max_err = float(jnp.max(jnp.abs(out - ref)))
    assert jnp.allclose(out, ref, atol=5e-3, rtol=5e-3), f"max abs err {max_err}"

    print("KERNEL_OK")
</pallas_src>

<mosaic_0001>
module attributes {stable_mosaic.version = 11 : i64} {
  func.func @_encoder_kernel(%arg0: i32, %arg1: memref<16x64xf32, #tpu.memory_space<vmem>>, %arg2: memref<64x512xf32, #tpu.memory_space<vmem>>, %arg3: memref<1x512xf32, #tpu.memory_space<vmem>>, %arg4: memref<512x512xf32, #tpu.memory_space<vmem>>, %arg5: memref<1x512xf32, #tpu.memory_space<vmem>>, %arg6: memref<512x512xf32, #tpu.memory_space<vmem>>, %arg7: memref<1x512xf32, #tpu.memory_space<vmem>>, %arg8: memref<512x128xf32, #tpu.memory_space<vmem>>, %arg9: memref<1x128xf32, #tpu.memory_space<vmem>>, %arg10: memref<16x128xf32, #tpu.memory_space<vmem>>, %arg11: memref<16x512xf32, #tpu.memory_space<vmem>>, %arg12: memref<16x512xf32, #tpu.memory_space<vmem>>) attributes {dimension_semantics = [#tpu.dimension_semantics<parallel>], iteration_bounds = array<i64: 1>, scalar_prefetch = 0 : i64, scratch_operands = 2 : i64, tpu.core_type = #tpu.core_type<tc>, window_params = [{transform_indices = @transform_0, window_bounds = array<i64: 16, 64>}, {pipeline_mode = #tpu.pipeline_mode<synchronous>, transform_indices = @transform_1, window_bounds = array<i64: 64, 512>}, {pipeline_mode = #tpu.pipeline_mode<synchronous>, transform_indices = @transform_2, window_bounds = array<i64: 1, 512>}, {pipeline_mode = #tpu.pipeline_mode<synchronous>, transform_indices = @transform_3, window_bounds = array<i64: 512, 512>}, {pipeline_mode = #tpu.pipeline_mode<synchronous>, transform_indices = @transform_4, window_bounds = array<i64: 1, 512>}, {pipeline_mode = #tpu.pipeline_mode<synchronous>, transform_indices = @transform_5, window_bounds = array<i64: 512, 512>}, {pipeline_mode = #tpu.pipeline_mode<synchronous>, transform_indices = @transform_6, window_bounds = array<i64: 1, 512>}, {pipeline_mode = #tpu.pipeline_mode<synchronous>, transform_indices = @transform_7, window_bounds = array<i64: 512, 128>}, {pipeline_mode = #tpu.pipeline_mode<synchronous>, transform_indices = @transform_8, window_bounds = array<i64: 1, 128>}, {transform_indices = @transform_9, window_bounds = array<i64: 16, 128>}]} {
    %c0 = arith.constant 0 : index
    %c0_0 = arith.constant 0 : index
    %0 = vector.load %arg1[%c0, %c0_0] : memref<16x64xf32, #tpu.memory_space<vmem>>, vector<16x64xf32>
    %c0_1 = arith.constant 0 : index
    %c0_2 = arith.constant 0 : index
    %1 = vector.load %arg2[%c0_1, %c0_2] : memref<64x512xf32, #tpu.memory_space<vmem>>, vector<64x512xf32>
    %cst = arith.constant dense<0.000000e+00> : vector<16x512xf32>
    %2 = tpu.matmul %0, %1, %cst {dimension_numbers = #tpu.dot_dimension_numbers<[1], [0], [0], [1], [0, 0, 1, 1], [], []>} : vector<16x64xf32>, vector<64x512xf32>, vector<16x512xf32> -> vector<16x512xf32>
    %c0_3 = arith.constant 0 : index
    %c0_4 = arith.constant 0 : index
    %3 = vector.load %arg3[%c0_3, %c0_4] : memref<1x512xf32, #tpu.memory_space<vmem>>, vector<1x512xf32>
    %4 = vector.broadcast %3 : vector<1x512xf32> to vector<16x512xf32>
    %5 = arith.addf %2, %4 : vector<16x512xf32>
    %cst_5 = arith.constant 0.000000e+00 : f32
    %6 = vector.broadcast %cst_5 : f32 to vector<16x512xf32>
    %7 = arith.maximumf %5, %6 : vector<16x512xf32>
    %c0_6 = arith.constant 0 : index
    %c0_7 = arith.constant 0 : index
    %8 = vector.load %arg11[%c0_6, %c0_7] : memref<16x512xf32, #tpu.memory_space<vmem>>, vector<16x512xf32>
    tpu.vector_store %arg11[%c0_6, %c0_7], %7 {strides = array<i32>} : memref<16x512xf32, #tpu.memory_space<vmem>>, vector<16x512xf32>,
    %c0_8 = arith.constant 0 : index
    %c0_9 = arith.constant 0 : index
    %9 = vector.load %arg11[%c0_8, %c0_9] : memref<16x512xf32, #tpu.memory_space<vmem>>, vector<16x512xf32>
    %c0_10 = arith.constant 0 : index
    %c0_11 = arith.constant 0 : index
    %10 = vector.load %arg4[%c0_10, %c0_11] : memref<512x512xf32, #tpu.memory_space<vmem>>, vector<512x512xf32>
    %cst_12 = arith.constant dense<0.000000e+00> : vector<16x512xf32>
    %11 = tpu.matmul %9, %10, %cst_12 {dimension_numbers = #tpu.dot_dimension_numbers<[1], [0], [0], [1], [0, 0, 1, 1], [], []>} : vector<16x512xf32>, vector<512x512xf32>, vector<16x512xf32> -> vector<16x512xf32>
    %c0_13 = arith.constant 0 : index
    %c0_14 = arith.constant 0 : index
    %12 = vector.load %arg5[%c0_13, %c0_14] : memref<1x512xf32, #tpu.memory_space<vmem>>, vector<1x512xf32>
    %13 = vector.broadcast %12 : vector<1x512xf32> to vector<16x512xf32>
    %14 = arith.addf %11, %13 : vector<16x512xf32>
    %cst_15 = arith.constant 0.000000e+00 : f32
    %15 = vector.broadcast %cst_15 : f32 to vector<16x512xf32>
    %16 = arith.maximumf %14, %15 : vector<16x512xf32>
    %c0_16 = arith.constant 0 : index
    %c0_17 = arith.constant 0 : index
    %17 = vector.load %arg12[%c0_16, %c0_17] : memref<16x512xf32, #tpu.memory_space<vmem>>, vector<16x512xf32>
    tpu.vector_store %arg12[%c0_16, %c0_17], %16 {strides = array<i32>} : memref<16x512xf32, #tpu.memory_space<vmem>>, vector<16x512xf32>,
    %c0_18 = arith.constant 0 : index
    %c0_19 = arith.constant 0 : index
    %18 = vector.load %arg12[%c0_18, %c0_19] : memref<16x512xf32, #tpu.memory_space<vmem>>, vector<16x512xf32>
    %c0_20 = arith.constant 0 : index
    %c0_21 = arith.constant 0 : index
    %19 = vector.load %arg6[%c0_20, %c0_21] : memref<512x512xf32, #tpu.memory_space<vmem>>, vector<512x512xf32>
    %cst_22 = arith.constant dense<0.000000e+00> : vector<16x512xf32>
    %20 = tpu.matmul %18, %19, %cst_22 {dimension_numbers = #tpu.dot_dimension_numbers<[1], [0], [0], [1], [0, 0, 1, 1], [], []>} : vector<16x512xf32>, vector<512x512xf32>, vector<16x512xf32> -> vector<16x512xf32>
    %c0_23 = arith.constant 0 : index
    %c0_24 = arith.constant 0 : index
    %21 = vector.load %arg7[%c0_23, %c0_24] : memref<1x512xf32, #tpu.memory_space<vmem>>, vector<1x512xf32>
    %22 = vector.broadcast %21 : vector<1x512xf32> to vector<16x512xf32>
    %23 = arith.addf %20, %22 : vector<16x512xf32>
    %cst_25 = arith.constant 0.000000e+00 : f32
    %24 = vector.broadcast %cst_25 : f32 to vector<16x512xf32>
    %25 = arith.maximumf %23, %24 : vector<16x512xf32>
    %c0_26 = arith.constant 0 : index
    %c0_27 = arith.constant 0 : index
    %26 = vector.load %arg11[%c0_26, %c0_27] : memref<16x512xf32, #tpu.memory_space<vmem>>, vector<16x512xf32>
    tpu.vector_store %arg11[%c0_26, %c0_27], %25 {strides = array<i32>} : memref<16x512xf32, #tpu.memory_space<vmem>>, vector<16x512xf32>,
    %c0_28 = arith.constant 0 : index
    %c0_29 = arith.constant 0 : index
    %27 = vector.load %arg11[%c0_28, %c0_29] : memref<16x512xf32, #tpu.memory_space<vmem>>, vector<16x512xf32>
    %c0_30 = arith.constant 0 : index
    %c0_31 = arith.constant 0 : index
    %28 = vector.load %arg8[%c0_30, %c0_31] : memref<512x128xf32, #tpu.memory_space<vmem>>, vector<512x128xf32>
    %cst_32 = arith.constant dense<0.000000e+00> : vector<16x128xf32>
    %29 = tpu.matmul %27, %28, %cst_32 {dimension_numbers = #tpu.dot_dimension_numbers<[1], [0], [0], [1], [0, 0, 1, 1], [], []>} : vector<16x512xf32>, vector<512x128xf32>, vector<16x128xf32> -> vector<16x128xf32>
    %c0_33 = arith.constant 0 : index
    %c0_34 = arith.constant 0 : index
    %30 = vector.load %arg9[%c0_33, %c0_34] : memref<1x128xf32, #tpu.memory_space<vmem>>, vector<1x128xf32>
    %31 = vector.broadcast %30 : vector<1x128xf32> to vector<16x128xf32>
    %32 = arith.addf %29, %31 : vector<16x128xf32>
    %c0_35 = arith.constant 0 : index
    %c0_36 = arith.constant 0 : index
    %33 = vector.load %arg10[%c0_35, %c0_36] : memref<16x128xf32, #tpu.memory_space<vmem>>, vector<16x128xf32>
    tpu.vector_store %arg10[%c0_35, %c0_36], %32 {strides = array<i32>} : memref<16x128xf32, #tpu.memory_space<vmem>>, vector<16x128xf32>,
    return
  }
  func.func @transform_0(%arg0: i32) -> (i32, i32) {
    %c0_i32 = arith.constant 0 : i32
    %c0_i32_0 = arith.constant 0 : i32
    return %arg0, %c0_i32 : i32, i32
  }
  func.func @transform_1(%arg0: i32) -> (i32, i32) {
    %c0_i32 = arith.constant 0 : i32
    %c0_i32_0 = arith.constant 0 : i32
    %c0_i32_1 = arith.constant 0 : i32
    return %c0_i32, %c0_i32_0 : i32, i32
  }
  func.func @transform_2(%arg0: i32) -> (i32, i32) {
    %c0_i32 = arith.constant 0 : i32
    %c0_i32_0 = arith.constant 0 : i32
    %c0_i32_1 = arith.constant 0 : i32
    return %c0_i32, %c0_i32_0 : i32, i32
  }
  func.func @transform_3(%arg0: i32) -> (i32, i32) {
    %c0_i32 = arith.constant 0 : i32
    %c0_i32_0 = arith.constant 0 : i32
    %c0_i32_1 = arith.constant 0 : i32
    return %c0_i32, %c0_i32_0 : i32, i32
  }
  func.func @transform_4(%arg0: i32) -> (i32, i32) {
    %c0_i32 = arith.constant 0 : i32
    %c0_i32_0 = arith.constant 0 : i32
    %c0_i32_1 = arith.constant 0 : i32
    return %c0_i32, %c0_i32_0 : i32, i32
  }
  func.func @transform_5(%arg0: i32) -> (i32, i32) {
    %c0_i32 = arith.constant 0 : i32
    %c0_i32_0 = arith.constant 0 : i32
    %c0_i32_1 = arith.constant 0 : i32
    return %c0_i32, %c0_i32_0 : i32, i32
  }
  func.func @transform_6(%arg0: i32) -> (i32, i32) {
    %c0_i32 = arith.constant 0 : i32
    %c0_i32_0 = arith.constant 0 : i32
    %c0_i32_1 = arith.constant 0 : i32
    return %c0_i32, %c0_i32_0 : i32, i32
  }
  func.func @transform_7(%arg0: i32) -> (i32, i32) {
    %c0_i32 = arith.constant 0 : i32
    %c0_i32_0 = arith.constant 0 : i32
    %c0_i32_1 = arith.constant 0 : i32
    return %c0_i32, %c0_i32_0 : i32, i32
  }
  func.func @transform_8(%arg0: i32) -> (i32, i32) {
    %c0_i32 = arith.constant 0 : i32
    %c0_i32_0 = arith.constant 0 : i32
    %c0_i32_1 = arith.constant 0 : i32
    return %c0_i32, %c0_i32_0 : i32, i32
  }
  func.func @transform_9(%arg0: i32) -> (i32, i32) {
    %c0_i32 = arith.constant 0 : i32
    %c0_i32_0 = arith.constant 0 : i32
    return %arg0, %c0_i32 : i32, i32
  }
}

</mosaic_0001>

<llo_original>
// kernel: tile.18
$region0: #{tile.18}
  #allocation0 [shape = 's32[1]{0}', space=sflag, size = 0x4, scoped, tag = 'scoped memory for tile.18']
  %s0 = inlined_call_operand.vmem [shape: f32[32], index: 0, kind: input, shape index: {}]
  %s1 = inlined_call_operand.vmem [shape: f32[16,32], index: 1, kind: output, shape index: {}]
  // Predicated region
  $region2: #{tile.18} parent=0 // pred_check
    _
  $region3: #{tile.18} parent=0 // pred_check_branch
    %3 = sbr.rel (0) target = $region5
  $region4: #{tile.18} parent=0 // pred_region
    _
  $region5: #{tile.18} parent=0 // pred_fallthru
    _
  %v4 = vld [vmem:[%s0] ss:$0 sm:$0xff]
  %5 = vst [vmem:[%s1] sm:$0xff] %v4
  %s6 = scalar_lea.vmem %s1, 8
  %7 = vst [vmem:[%s6] sm:$0xff] %v4

// kernel: tile.27
$region0: #{tile.27}
  %s0 = inlined_call_operand.vmem [shape: f32[16,32], index: 0, kind: input, shape index: {}]
  %s1 = inlined_call_operand.vmem [shape: f32[1,512], index: 1, kind: output, shape index: {}]
  $region1: #{tile.27} parent=0
    #allocation0 [shape = 'u8[16384]{0}', space=vmem, size = 0x4000, scoped, tag = 'scoped mem for output reshape']
    %v2 = vld [vmem:[%s0] ss:$4 sm:$0xf]
    %vm3 = vcmask 261120
    %4 = vst.msk [vmem:[#allocation0] ss:$8 sm:$0xf] %vm3, %v2
    %s5 = scalar_lea.vmem %s0, 3
    %v6 = vld [vmem:[%s5] ss:$4 sm:$0xf]
    %7 = vrot.lane.b32.xlu0 %v6, 96
    %v8 = vpop.permute.xlu0 %7
    %vm9 = vcmask 1048320
    %10 = vst.msk [vmem:[#allocation0] ss:$8 sm:$0xf] %vm9, %v8
    %s11 = scalar_lea.vmem %s0, 2
    %v12 = vld [vmem:[%s11] ss:$4 sm:$0xf]
    %13 = vrot.lane.b32.xlu0 %v12, 64
    %v14 = vpop.permute.xlu0 %13
    %vm15 = vcmask 785920
    %16 = vst.msk [vmem:[#allocation0] ss:$8 sm:$0xf] %vm15, %v14
    %s17 = scalar_lea.vmem %s0, 1
    %v18 = vld [vmem:[%s17] ss:$4 sm:$0xf]
    %19 = vrot.lane.b32.xlu0 %v18, 32
    %v20 = vpop.permute.xlu0 %19
    %vm21 = vcmask 523520
    %22 = vst.msk [vmem:[#allocation0] ss:$8 sm:$0xf] %vm21, %v20
    %s24 = sshllo.u32 0, 1
    %v26 = vld [vmem:[#allocation0] sm:%s24]
    %s27 = sshllo.u32 0, 1
    %28 = vst [vmem:[%s1] sm:%s27] %v26
    %s29 = scalar_lea.vmem [#allocation0], 8
    %v30 = vld [vmem:[%s29] sm:%s24]
    %s31 = sshllo.u32 0, 1
    %s32 = scalar_lea.vmem %s1, 1
    %33 = vst [vmem:[%s32] sm:%s31] %v30
    %s34 = scalar_lea.vmem [#allocation0], 16
    %v35 = vld [vmem:[%s34] sm:%s24]
    %s36 = sshllo.u32 0, 1
    %s37 = smul.addr 1, 2
    %s38 = scalar_lea.vmem %s1, %s37
    %39 = vst [vmem:[%s38] sm:%s36] %v35
    %s40 = scalar_lea.vmem [#allocation0], 24
    %v41 = vld [vmem:[%s40] sm:%s24]
    %s42 = sshllo.u32 0, 1
    %s43 = smul.addr 1, 3
    %s44 = scalar_lea.vmem %s1, %s43
    %45 = vst [vmem:[%s44] sm:%s42] %v41

// kernel: base_encoder_t_forward.1
$region0: #{base_encoder_t_forward.1}
  #allocation0 [shape = 'u32[]', space=smem, size = 0x4, offset = 0x4, fixed_abs, tag = 'smem constant byte address 0x4 - core index']
  #allocation1 [shape = 'u32[144,128]{1,0:T(1,128)}', space=vmem, size = 0x12000, scoped, tag = 'internal scratch']
  #allocation2 [shape = 'f32[16,512]{1,0:T(8,128)}', space=vmem, size = 0x8000, scoped, tag = 'scratch operand']
  #allocation3 [shape = 'f32[16,512]{1,0:T(8,128)}', space=vmem, size = 0x8000, scoped, tag = 'scratch operand']
  %s0 = inlined_call_operand.vmem [shape: f32[16,64], index: 0, kind: input, shape index: {}]
  %s1 = inlined_call_operand.vmem [shape: f32[64,512], index: 1, kind: input, shape index: {}]
  %s2 = inlined_call_operand.vmem [shape: f32[1,512], index: 2, kind: input, shape index: {}]
  %s3 = inlined_call_operand.vmem [shape: f32[512,512], index: 3, kind: input, shape index: {}]
  %s4 = inlined_call_operand.vmem [shape: f32[1,512], index: 4, kind: input, shape index: {}]
  %s5 = inlined_call_operand.vmem [shape: f32[512,512], index: 5, kind: input, shape index: {}]
  %s6 = inlined_call_operand.vmem [shape: f32[1,512], index: 6, kind: input, shape index: {}]
  %s7 = inlined_call_operand.vmem [shape: f32[512,128], index: 7, kind: input, shape index: {}]
  %s8 = inlined_call_operand.vmem [shape: f32[1,128], index: 8, kind: input, shape index: {}]
  %s9 = inlined_call_operand.vmem [shape: f32[16,128], index: 9, kind: output, shape index: {}]
  %s10 = sld [smem:[#allocation0]]
  $region46: #{base_encoder_t_forward.1} parent=0
    _
  %s12 = ssub.s32 1, %s10
  %s13 = scalar_select 0, %s12, %s10
  // Predicated region
  $region2: #{base_encoder_t_forward.1} parent=0 // pred_check
    _
  $region3: #{base_encoder_t_forward.1} parent=0 // pred_check_branch
    %15 = sbr.rel (0) target = $region5
  $region4: #{base_encoder_t_forward.1} parent=0 // pred_region
    _
  $region5: #{base_encoder_t_forward.1} parent=0 // pred_fallthru
    _
  // Predicated region
  $region6: #{base_encoder_t_forward.1} parent=0 // pred_check
    _
  $region7: #{base_encoder_t_forward.1} parent=0 // pred_check_branch
    %17 = sbr.rel (0) target = $region9
  $region8: #{base_encoder_t_forward.1} parent=0 // pred_region
    _
  $region9: #{base_encoder_t_forward.1} parent=0 // pred_fallthru
    _
  // Predicated region
  $region10: #{base_encoder_t_forward.1} parent=0 // pred_check
    _
  $region11: #{base_encoder_t_forward.1} parent=0 // pred_check_branch
    %19 = sbr.rel (0) target = $region13
  $region12: #{base_encoder_t_forward.1} parent=0 // pred_region
    _
  $region13: #{base_encoder_t_forward.1} parent=0 // pred_fallthru
    _
  // Predicated region
  $region14: #{base_encoder_t_forward.1} parent=0 // pred_check
    _
  $region15: #{base_encoder_t_forward.1} parent=0 // pred_check_branch
    %21 = sbr.rel (0) target = $region17
  $region16: #{base_encoder_t_forward.1} parent=0 // pred_region
    _
  $region17: #{base_encoder_t_forward.1} parent=0 // pred_fallthru
    _
  // Predicated region
  $region18: #{base_encoder_t_forward.1} parent=0 // pred_check
    _
  $region19: #{base_encoder_t_forward.1} parent=0 // pred_check_branch
    %23 = sbr.rel (0) target = $region21
  $region20: #{base_encoder_t_forward.1} parent=0 // pred_region
    _
  $region21: #{base_encoder_t_forward.1} parent=0 // pred_fallthru
    _
  // Predicated region
  $region22: #{base_encoder_t_forward.1} parent=0 // pred_check
    _
  $region23: #{base_encoder_t_forward.1} parent=0 // pred_check_branch
    %25 = sbr.rel (0) target = $region25
  $region24: #{base_encoder_t_forward.1} parent=0 // pred_region
    _
  $region25: #{base_encoder_t_forward.1} parent=0 // pred_fallthru
    _
  // Predicated region
  $region26: #{base_encoder_t_forward.1} parent=0 // pred_check
    _
  $region27: #{base_encoder_t_forward.1} parent=0 // pred_check_branch
    %27 = sbr.rel (0) target = $region29
  $region28: #{base_encoder_t_forward.1} parent=0 // pred_region
    _
  $region29: #{base_encoder_t_forward.1} parent=0 // pred_fallthru
    _
  // Predicated region
  $region30: #{base_encoder_t_forward.1} parent=0 // pred_check
    _
  $region31: #{base_encoder_t_forward.1} parent=0 // pred_check_branch
    %29 = sbr.rel (0) target = $region33
  $region32: #{base_encoder_t_forward.1} parent=0 // pred_region
    _
  $region33: #{base_encoder_t_forward.1} parent=0 // pred_fallthru
    _
  // Predicated region
  $region34: #{base_encoder_t_forward.1} parent=0 // pred_check
    _
  $region35: #{base_encoder_t_forward.1} parent=0 // pred_check_branch
    %31 = sbr.rel (0) target = $region37
  $region36: #{base_encoder_t_forward.1} parent=0 // pred_region
    _
  $region37: #{base_encoder_t_forward.1} parent=0 // pred_fallthru
    _
  %v32 = vld [vmem:[%s0] sm:$0xff]
  %v33 = vld [vmem:[%s0 + $0x8] sm:$0xff]
  %v34 = vld [vmem:[%s1] sm:$0xff]
  %v35 = vld [vmem:[%s1 + $0x8] sm:$0xff]
  %v36 = vld [vmem:[%s1 + $0x10] sm:$0xff]
  %v37 = vld [vmem:[%s1 + $0x18] sm:$0xff]
  %v38 = vld [vmem:[%s1 + $0x20] sm:$0xff]
  %v39 = vld [vmem:[%s1 + $0x28] sm:$0xff]
  %v40 = vld [vmem:[%s1 + $0x30] sm:$0xff]
  %v41 = vld [vmem:[%s1 + $0x38] sm:$0xff]
  %v42 = vld [vmem:[%s1 + $0x40] sm:$0xff]
  %v43 = vld [vmem:[%s1 + $0x48] sm:$0xff]
  %v44 = vld [vmem:[%s1 + $0x50] sm:$0xff]
  %v45 = vld [vmem:[%s1 + $0x58] sm:$0xff]
  %v46 = vld [vmem:[%s1 + $0x60] sm:$0xff]
  %v47 = vld [vmem:[%s1 + $0x68] sm:$0xff]
  %v48 = vld [vmem:[%s1 + $0x70] sm:$0xff]
  %v49 = vld [vmem:[%s1 + $0x78] sm:$0xff]
  %v50 = vld [vmem:[%s1 + $0x80] sm:$0xff]
  %v51 = vld [vmem:[%s1 + $0x88] sm:$0xff]
  %v52 = vld [vmem:[%s1 + $0x90] sm:$0xff]
  %v53 = vld [vmem:[%s1 + $0x98] sm:$0xff]
  %v54 = vld [vmem:[%s1 + $0xa0] sm:$0xff]
  %v55 = vld [vmem:[%s1 + $0xa8] sm:$0xff]
  %v56 = vld [vmem:[%s1 + $0xb0] sm:$0xff]
  %v57 = vld [vmem:[%s1 + $0xb8] sm:$0xff]
  %v58 = vld [vmem:[%s1 + $0xc0] sm:$0xff]
  %v59 = vld [vmem:[%s1 + $0xc8] sm:$0xff]
  %v60 = vld [vmem:[%s1 + $0xd0] sm:$0xff]
  %v61 = vld [vmem:[%s1 + $0xd8] sm:$0xff]
  %v62 = vld [vmem:[%s1 + $0xe0] sm:$0xff]
  %v63 = vld [vmem:[%s1 + $0xe8] sm:$0xff]
  %v64 = vld [vmem:[%s1 + $0xf0] sm:$0xff]
  %v65 = vld [vmem:[%s1 + $0xf8] sm:$0xff]
  %v66 = vld [vmem:[%s2] sm:$0xf]
  %v68 = vlaneseq
  %v69 = vshrl.u32 %v68, 7
  %v70 = vsub.s32 0, %v69
  %v71 = vrot.slane %v66, %v70
  %v72 = vlaneseq
  %v73 = vshrl.u32 %v72, 7
  %v74 = vsub.s32 1, %v73
  %v75 = vrot.slane %v66, %v74
  %v76 = vlaneseq
  %v77 = vshrl.u32 %v76, 7
  %v78 = vsub.s32 2, %v77
  %v79 = vrot.slane %v66, %v78
  %v80 = vlaneseq
  %v81 = vshrl.u32 %v80, 7
  %v82 = vsub.s32 3, %v81
  %v83 = vrot.slane %v66, %v82
  %vm88 = vcmask 523264
  %v90 = vsel %vm88, %v32, 0
  %v93 = vsel %vm88, %v33, 0
  %95 = vmatprep.subr.mxu0 %v35
  %96 = vmatpush1.msra.mxu0 %v34
  %97 = vmatprep.subr.mxu0 %v39
  %98 = vmatpush1.msra.mxu0 %v38
  %99 = vmatprep.subr.mxu0 %v43
  %100 = vmatpush1.msra.mxu0 %v42
  %101 = vmatprep.subr.mxu0 %v47
  %102 = vmatpush1.msra.mxu0 %v46
  %103 = vmatprep.subr.mxu0 %v51
  %104 = vmatpush1.msra.mxu0 %v50
  %105 = vmatprep.subr.mxu0 %v55
  %106 = vmatpush1.msra.mxu0 %v54
  %107 = vmatprep.subr.mxu0 %v59
  %108 = vmatpush1.msra.mxu0 %v58
  %109 = vmatprep.subr.mxu0 %v63
  %110 = vmatpush1.msra.mxu0 %v62
  %111 = vmatprep.subr.mxu0 0.0
  %112 = vmatpush1.msra.mxu0 0.0
  %113 = vmatprep.subr.mxu0 0.0
  %114 = vmatpush1.msra.mxu0 0.0
  %115 = vmatprep.subr.mxu0 0.0
  %116 = vmatpush1.msra.mxu0 0.0
  %117 = vmatprep.subr.mxu0 0.0
  %118 = vmatpush1.msra.mxu0 0.0
  %119 = vmatprep.subr.mxu0 0.0
  %120 = vmatpush1.msra.mxu0 0.0
  %121 = vmatprep.subr.mxu0 0.0
  %122 = vmatpush1.msra.mxu0 0.0
  %123 = vmatprep.subr.mxu0 0.0
  %124 = vmatpush1.msra.mxu0 0.0
  %125 = vmatprep.subr.mxu0 0.0
  %126 = vmatpush1.msra.mxu0 0.0
  %127 = vmatprep.subr.mxu0 0.0
  %128 = vmatpush1.msra.mxu0 0.0
  %129 = vmatprep.subr.mxu0 0.0
  %130 = vmatpush1.msra.mxu0 0.0
  %131 = vmatprep.subr.mxu0 0.0
  %132 = vmatpush1.msra.mxu0 0.0
  %133 = vmatprep.subr.mxu0 0.0
  %134 = vmatpush1.msra.mxu0 0.0
  %135 = vmatprep.subr.mxu0 0.0
  %136 = vmatpush1.msra.mxu0 0.0
  %137 = vmatprep.subr.mxu0 0.0
  %138 = vmatpush1.msra.mxu0 0.0
  %139 = vmatprep.subr.mxu0 0.0
  %140 = vmatpush1.msra.mxu0 0.0
  %141 = vmatprep.subr.mxu0 0.0
  %142 = vmatpush1.msra.mxu0 0.0
  %143 = vmatprep.subr.mxu0 0.0
  %144 = vmatpush1.msra.mxu0 0.0
  %145 = vmatprep.subr.mxu0 0.0
  %146 = vmatpush1.msra.mxu0 0.0
  %147 = vmatprep.subr.mxu0 0.0
  %148 = vmatpush1.msra.mxu0 0.0
  %149 = vmatprep.subr.mxu0 0.0
  %150 = vmatpush1.msra.mxu0 0.0
  %151 = vmatprep.subr.mxu0 0.0
  %152 = vmatpush1.msra.mxu0 0.0
  %153 = vmatprep.subr.mxu0 0.0
  %154 = vmatpush1.msra.mxu0 0.0
  %155 = vmatprep.subr.mxu0 0.0
  %156 = vmatpush1.msra.mxu0 0.0
  %157 = vmatprep.subr.mxu0 0.0
  %158 = vmatpush1.msra.mxu0 0.0
  %159 = vmatprep.mubr.f32.mxu0 0.0
  %160 = vmatmul.mubr.f32.gmra.mrb[0].mxu0 %v90
  %v161 = vpop.f32.mrb[0].mxu0
  %v162 = vadd.f32 %v71, %v161
  %v163 = vpop.f32.mrb[0].mxu0
  %v164 = vadd.f32 %v75, %v163
  %165 = vmatprep.mubr.f32.mxu0 0.0
  %166 = vmatmul.mubr.f32.gmra.mrb[0].mxu0 %v93
  %v167 = vpop.f32.mrb[0].mxu0
  %v168 = vadd.f32 %v71, %v167
  %v169 = vpop.f32.mrb[0].mxu0
  %v170 = vadd.f32 %v75, %v169
  %171 = vdwg.mxu0
  %172 = vmatprep.subr.mxu0 %v37
  %173 = vmatpush1.msra.mxu0 %v36
  %174 = vmatprep.subr.mxu0 %v41
  %175 = vmatpush1.msra.mxu0 %v40
  %176 = vmatprep.subr.mxu0 %v45
  %177 = vmatpush1.msra.mxu0 %v44
  %178 = vmatprep.subr.mxu0 %v49
  %179 = vmatpush1.msra.mxu0 %v48
  %180 = vmatprep.subr.mxu0 %v53
  %181 = vmatpush1.msra.mxu0 %v52
  %182 = vmatprep.subr.mxu0 %v57
  %183 = vmatpush1.msra.mxu0 %v56
  %184 = vmatprep.subr.mxu0 %v61
  %185 = vmatpush1.msra.mxu0 %v60
  %186 = vmatprep.subr.mxu0 %v65
  %187 = vmatpush1.msra.mxu0 %v64
  %188 = vmatprep.subr.mxu0 0.0
  %189 = vmatpush1.msra.mxu0 0.0
  %190 = vmatprep.subr.mxu0 0.0
  %191 = vmatpush1.msra.mxu0 0.0
  %192 = vmatprep.subr.mxu0 0.0
  %193 = vmatpush1.msra.mxu0 0.0
  %194 = vmatprep.subr.mxu0 0.0
  %195 = vmatpush1.msra.mxu0 0.0
  %196 = vmatprep.subr.mxu0 0.0
  %197 = vmatpush1.msra.mxu0 0.0
  %198 = vmatprep.subr.mxu0 0.0
  %199 = vmatpush1.msra.mxu0 0.0
  %200 = vmatprep.subr.mxu0 0.0
  %201 = vmatpush1.msra.mxu0 0.0
  %202 = vmatprep.subr.mxu0 0.0
  %203 = vmatpush1.msra.mxu0 0.0
  %204 = vmatprep.subr.mxu0 0.0
  %205 = vmatpush1.msra.mxu0 0.0
  %206 = vmatprep.subr.mxu0 0.0
  %207 = vmatpush1.msra.mxu0 0.0
  %208 = vmatprep.subr.mxu0 0.0
  %209 = vmatpush1.msra.mxu0 0.0
  %210 = vmatprep.subr.mxu0 0.0
  %211 = vmatpush1.msra.mxu0 0.0
  %212 = vmatprep.subr.mxu0 0.0
  %213 = vmatpush1.msra.mxu0 0.0
  %214 = vmatprep.subr.mxu0 0.0
  %215 = vmatpush1.msra.mxu0 0.0
  %216 = vmatprep.subr.mxu0 0.0
  %217 = vmatpush1.msra.mxu0 0.0
  %218 = vmatprep.subr.mxu0 0.0
  %219 = vmatpush1.msra.mxu0 0.0
  %220 = vmatprep.subr.mxu0 0.0
  %221 = vmatpush1.msra.mxu0 0.0
  %222 = vmatprep.subr.mxu0 0.0
  %223 = vmatpush1.msra.mxu0 0.0
  %224 = vmatprep.subr.mxu0 0.0
  %225 = vmatpush1.msra.mxu0 0.0
  %226 = vmatprep.subr.mxu0 0.0
  %227 = vmatpush1.msra.mxu0 0.0
  %228 = vmatprep.subr.mxu0 0.0
  %229 = vmatpush1.msra.mxu0 0.0
  %230 = vmatprep.subr.mxu0 0.0
  %231 = vmatpush1.msra.mxu0 0.0
  %232 = vmatprep.subr.mxu0 0.0
  %233 = vmatpush1.msra.mxu0 0.0
  %234 = vmatprep.subr.mxu0 0.0
  %235 = vmatpush1.msra.mxu0 0.0
  %236 = vmatprep.mubr.f32.mxu0 0.0
  %237 = vmatmul.mubr.f32.gmra.mrb[0].mxu0 %v90
  %v238 = vpop.f32.mrb[0].mxu0
  %v239 = vadd.f32 %v79, %v238
  %v240 = vpop.f32.mrb[0].mxu0
  %v241 = vadd.f32 %v83, %v240
  %242 = vmatprep.mubr.f32.mxu0 0.0
  %243 = vmatmul.mubr.f32.gmra.mrb[0].mxu0 %v93
  %v244 = vpop.f32.mrb[0].mxu0
  %v245 = vadd.f32 %v79, %v244
  %v246 = vpop.f32.mrb[0].mxu0
  %v247 = vadd.f32 %v83, %v246
  %248 = vdwg.mxu0
  %v249 = vmax.f32 %v162, 0.0
  %v250 = vmax.f32 %v164, 0.0
  %v251 = vmax.f32 %v239, 0.0
  %v252 = vmax.f32 %v241, 0.0
  %v253 = vmax.f32 %v168, 0.0
  %v254 = vmax.f32 %v170, 0.0
  %v255 = vmax.f32 %v245, 0.0
  %v256 = vmax.f32 %v247, 0.0
  %257 = vst [vmem:[#allocation2] sm:$0xff] %v249
  %258 = vst [vmem:[#allocation2 + $0x8] sm:$0xff] %v250
  %259 = vst [vmem:[#allocation2 + $0x10] sm:$0xff] %v251
  %260 = vst [vmem:[#allocation2 + $0x18] sm:$0xff] %v252
  %261 = vst [vmem:[#allocation2 + $0x20] sm:$0xff] %v253
  %262 = vst [vmem:[#allocation2 + $0x28] sm:$0xff] %v254
  %263 = vst [vmem:[#allocation2 + $0x30] sm:$0xff] %v255
  %264 = vst [vmem:[#allocation2 + $0x38] sm:$0xff] %v256
  %v265 = vld [vmem:[#allocation2] sm:$0xff]
  %v266 = vld [vmem:[#allocation2 + $0x8] sm:$0xff]
  %v267 = vld [vmem:[#allocation2 + $0x10] sm:$0xff]
  %v268 = vld [vmem:[#allocation2 + $0x18] sm:$0xff]
  %v269 = vld [vmem:[#allocation2 + $0x20] sm:$0xff]
  %v270 = vld [vmem:[#allocation2 + $0x28] sm:$0xff]
  %v271 = vld [vmem:[#allocation2 + $0x30] sm:$0xff]
  %v272 = vld [vmem:[#allocation2 + $0x38] sm:$0xff]
  %v273 = vld [vmem:[%s3] sm:$0xff]
  %v274 = vld [vmem:[%s3 + $0x8] sm:$0xff]
  %v275 = vld [vmem:[%s3 + $0x10] sm:$0xff]
  %v276 = vld [vmem:[%s3 + $0x18] sm:$0xff]
  %v277 = vld [vmem:[%s3 + $0x20] sm:$0xff]
  %v278 = vld [vmem:[%s3 + $0x28] sm:$0xff]
  %v279 = vld [vmem:[%s3 + $0x30] sm:$0xff]
  %v280 = vld [vmem:[%s3 + $0x38] sm:$0xff]
  %v281 = vld [vmem:[%s3 + $0x40] sm:$0xff]
  %v282 = vld [vmem:[%s3 + $0x48] sm:$0xff]
  %v283 = vld [vmem:[%s3 + $0x50] sm:$0xff]
  %v284 = vld [vmem:[%s3 + $0x58] sm:$0xff]
  %v285 = vld [vmem:[%s3 + $0x60] sm:$0xff]
  %v286 = vld [vmem:[%s3 + $0x68] sm:$0xff]
  %v287 = vld [vmem:[%s3 + $0x70] sm:$0xff]
  %v288 = vld [vmem:[%s3 + $0x78] sm:$0xff]
  %v289 = vld [vmem:[%s3 + $0x80] sm:$0xff]
  %v290 = vld [vmem:[%s3 + $0x88] sm:$0xff]
  %v291 = vld [vmem:[%s3 + $0x90] sm:$0xff]
  %v292 = vld [vmem:[%s3 + $0x98] sm:$0xff]
  %v293 = vld [vmem:[%s3 + $0xa0] sm:$0xff]
  %v294 = vld [vmem:[%s3 + $0xa8] sm:$0xff]
  %v295 = vld [vmem:[%s3 + $0xb0] sm:$0xff]
  %v296 = vld [vmem:[%s3 + $0xb8] sm:$0xff]
  %v297 = vld [vmem:[%s3 + $0xc0] sm:$0xff]
  %v298 = vld [vmem:[%s3 + $0xc8] sm:$0xff]
  %v299 = vld [vmem:[%s3 + $0xd0] sm:$0xff]
  %v300 = vld [vmem:[%s3 + $0xd8] sm:$0xff]
  %v301 = vld [vmem:[%s3 + $0xe0] sm:$0xff]
  %v302 = vld [vmem:[%s3 + $0xe8] sm:$0xff]
  %v303 = vld [vmem:[%s3 + $0xf0] sm:$0xff]
  %v304 = vld [vmem:[%s3 + $0xf8] sm:$0xff]
  %v305 = vld [vmem:[%s3 + $0x100] sm:$0xff]
  %v306 = vld [vmem:[%s3 + $0x108] sm:$0xff]
  %v307 = vld [vmem:[%s3 + $0x110] sm:$0xff]
  %v308 = vld [vmem:[%s3 + $0x118] sm:$0xff]
  %v309 = vld [vmem:[%s3 + $0x120] sm:$0xff]
  %v310 = vld [vmem:[%s3 + $0x128] sm:$0xff]
  %v311 = vld [vmem:[%s3 + $0x130] sm:$0xff]
  %v312 = vld [vmem:[%s3 + $0x138] sm:$0xff]
  %v313 = vld [vmem:[%s3 + $0x140] sm:$0xff]
  %v314 = vld [vmem:[%s3 + $0x148] sm:$0xff]
  %v315 = vld [vmem:[%s3 + $0x150] sm:$0xff]
  %v316 = vld [vmem:[%s3 + $0x158] sm:$0xff]
  %v317 = vld [vmem:[%s3 + $0x160] sm:$0xff]
  %v318 = vld [vmem:[%s3 + $0x168] sm:$0xff]
  %v319 = vld [vmem:[%s3 + $0x170] sm:$0xff]
  %v320 = vld [vmem:[%s3 + $0x178] sm:$0xff]
  %v321 = vld [vmem:[%s3 + $0x180] sm:$0xff]
  %v322 = vld [vmem:[%s3 + $0x188] sm:$0xff]
  %v323 = vld [vmem:[%s3 + $0x190] sm:$0xff]
  %v324 = vld [vmem:[%s3 + $0x198] sm:$0xff]
  %v325 = vld [vmem:[%s3 + $0x1a0] sm:$0xff]
  %v326 = vld [vmem:[%s3 + $0x1a8] sm:$0xff]
  %v327 = vld [vmem:[%s3 + $0x1b0] sm:$0xff]
  %v328 = vld [vmem:[%s3 + $0x1b8] sm:$0xff]
  %v329 = vld [vmem:[%s3 + $0x1c0] sm:$0xff]
  %v330 = vld [vmem:[%s3 + $0x1c8] sm:$0xff]
  %v331 = vld [vmem:[%s3 + $0x1d0] sm:$0xff]
  %v332 = vld [vmem:[%s3 + $0x1d8] sm:$0xff]
  %v333 = vld [vmem:[%s3 + $0x1e0] sm:$0xff]
  %v334 = vld [vmem:[%s3 + $0x1e8] sm:$0xff]
  %v335 = vld [vmem:[%s3 + $0x1f0] sm:$0xff]
  %v336 = vld [vmem:[%s3 + $0x1f8] sm:$0xff]
  %v337 = vld [vmem:[%s3 + $0x200] sm:$0xff]
  %v338 = vld [vmem:[%s3 + $0x208] sm:$0xff]
  %v339 = vld [vmem:[%s3 + $0x210] sm:$0xff]
  %v340 = vld [vmem:[%s3 + $0x218] sm:$0xff]
  %v341 = vld [vmem:[%s3 + $0x220] sm:$0xff]
  %v342 = vld [vmem:[%s3 + $0x228] sm:$0xff]
  %v343 = vld [vmem:[%s3 + $0x230] sm:$0xff]
  %v344 = vld [vmem:[%s3 + $0x238] sm:$0xff]
  %v345 = vld [vmem:[%s3 + $0x240] sm:$0xff]
  %v346 = vld [vmem:[%s3 + $0x248] sm:$0xff]
  %v347 = vld [vmem:[%s3 + $0x250] sm:$0xff]
  %v348 = vld [vmem:[%s3 + $0x258] sm:$0xff]
  %v349 = vld [vmem:[%s3 + $0x260] sm:$0xff]
  %v350 = vld [vmem:[%s3 + $0x268] sm:$0xff]
  %v351 = vld [vmem:[%s3 + $0x270] sm:$0xff]
  %v352 = vld [vmem:[%s3 + $0x278] sm:$0xff]
  %v353 = vld [vmem:[%s3 + $0x280] sm:$0xff]
  %v354 = vld [vmem:[%s3 + $0x288] sm:$0xff]
  %v355 = vld [vmem:[%s3 + $0x290] sm:$0xff]
  %v356 = vld [vmem:[%s3 + $0x298] sm:$0xff]
  %v357 = vld [vmem:[%s3 + $0x2a0] sm:$0xff]
  %v358 = vld [vmem:[%s3 + $0x2a8] sm:$0xff]
  %v359 = vld [vmem:[%s3 + $0x2b0] sm:$0xff]
  %v360 = vld [vmem:[%s3 + $0x2b8] sm:$0xff]
  %v361 = vld [vmem:[%s3 + $0x2c0] sm:$0xff]
  %v362 = vld [vmem:[%s3 + $0x2c8] sm:$0xff]
  %v363 = vld [vmem:[%s3 + $0x2d0] sm:$0xff]
  %v364 = vld [vmem:[%s3 + $0x2d8] sm:$0xff]
  %v365 = vld [vmem:[%s3 + $0x2e0] sm:$0xff]
  %v366 = vld [vmem:[%s3 + $0x2e8] sm:$0xff]
  %v367 = vld [vmem:[%s3 + $0x2f0] sm:$0xff]
  %v368 = vld [vmem:[%s3 + $0x2f8] sm:$0xff]
  %v369 = vld [vmem:[%s3 + $0x300] sm:$0xff]
  %v370 = vld [vmem:[%s3 + $0x308] sm:$0xff]
  %v371 = vld [vmem:[%s3 + $0x310] sm:$0xff]
  %v372 = vld [vmem:[%s3 + $0x318] sm:$0xff]
  %v373 = vld [vmem:[%s3 + $0x320] sm:$0xff]
  %v374 = vld [vmem:[%s3 + $0x328] sm:$0xff]
  %v375 = vld [vmem:[%s3 + $0x330] sm:$0xff]
  %v376 = vld [vmem:[%s3 + $0x338] sm:$0xff]
  %v377 = vld [vmem:[%s3 + $0x340] sm:$0xff]
  %v378 = vld [vmem:[%s3 + $0x348] sm:$0xff]
  %v379 = vld [vmem:[%s3 + $0x350] sm:$0xff]
  %v380 = vld [vmem:[%s3 + $0x358] sm:$0xff]
  %v381 = vld [vmem:[%s3 + $0x360] sm:$0xff]
  %v382 = vld [vmem:[%s3 + $0x368] sm:$0xff]
  %v383 = vld [vmem:[%s3 + $0x370] sm:$0xff]
  %v384 = vld [vmem:[%s3 + $0x378] sm:$0xff]
  %v385 = vld [vmem:[%s3 + $0x380] sm:$0xff]
  %v386 = vld [vmem:[%s3 + $0x388] sm:$0xff]
  %v387 = vld [vmem:[%s3 + $0x390] sm:$0xff]
  %v388 = vld [vmem:[%s3 + $0x398] sm:$0xff]
  %v389 = vld [vmem:[%s3 + $0x3a0] sm:$0xff]
  %v390 = vld [vmem:[%s3 + $0x3a8] sm:$0xff]
  %v391 = vld [vmem:[%s3 + $0x3b0] sm:$0xff]
  %v392 = vld [vmem:[%s3 + $0x3b8] sm:$0xff]
  %v393 = vld [vmem:[%s3 + $0x3c0] sm:$0xff]
  %v394 = vld [vmem:[%s3 + $0x3c8] sm:$0xff]
  %v395 = vld [vmem:[%s3 + $0x3d0] sm:$0xff]
  %v396 = vld [vmem:[%s3 + $0x3d8] sm:$0xff]
  %v397 = vld [vmem:[%s3 + $0x3e0] sm:$0xff]
  %v398 = vld [vmem:[%s3 + $0x3e8] sm:$0xff]
  %v399 = vld [vmem:[%s3 + $0x3f0] sm:$0xff]
  %v400 = vld [vmem:[%s3 + $0x3f8] sm:$0xff]
  %v401 = vld [vmem:[%s3 + $0x400] sm:$0xff]
  %v402 = vld [vmem:[%s3 + $0x408] sm:$0xff]
  %v403 = vld [vmem:[%s3 + $0x410] sm:$0xff]
  %v404 = vld [vmem:[%s3 + $0x418] sm:$0xff]
  %v405 = vld [vmem:[%s3 + $0x420] sm:$0xff]
  %v406 = vld [vmem:[%s3 + $0x428] sm:$0xff]
  %v407 = vld [vmem:[%s3 + $0x430] sm:$0xff]
  %v408 = vld [vmem:[%s3 + $0x438] sm:$0xff]
  %v409 = vld [vmem:[%s3 + $0x440] sm:$0xff]
  %v410 = vld [vmem:[%s3 + $0x448] sm:$0xff]
  %v411 = vld [vmem:[%s3 + $0x450] sm:$0xff]
  %v412 = vld [vmem:[%s3 + $0x458] sm:$0xff]
  %v413 = vld [vmem:[%s3 + $0x460] sm:$0xff]
  %v414 = vld [vmem:[%s3 + $0x468] sm:$0xff]
  %v415 = vld [vmem:[%s3 + $0x470] sm:$0xff]
  %v416 = vld [vmem:[%s3 + $0x478] sm:$0xff]
  %v417 = vld [vmem:[%s3 + $0x480] sm:$0xff]
  %v418 = vld [vmem:[%s3 + $0x488] sm:$0xff]
  %v419 = vld [vmem:[%s3 + $0x490] sm:$0xff]
  %v420 = vld [vmem:[%s3 + $0x498] sm:$0xff]
  %v421 = vld [vmem:[%s3 + $0x4a0] sm:$0xff]
  %v422 = vld [vmem:[%s3 + $0x4a8] sm:$0xff]
  %v423 = vld [vmem:[%s3 + $0x4b0] sm:$0xff]
  %v424 = vld [vmem:[%s3 + $0x4b8] sm:$0xff]
  %v425 = vld [vmem:[%s3 + $0x4c0] sm:$0xff]
  %v426 = vld [vmem:[%s3 + $0x4c8] sm:$0xff]
  %v427 = vld [vmem:[%s3 + $0x4d0] sm:$0xff]
  %v428 = vld [vmem:[%s3 + $0x4d8] sm:$0xff]
  %v429 = vld [vmem:[%s3 + $0x4e0] sm:$0xff]
  %v430 = vld [vmem:[%s3 + $0x4e8] sm:$0xff]
  %v431 = vld [vmem:[%s3 + $0x4f0] sm:$0xff]
  %v432 = vld [vmem:[%s3 + $0x4f8] sm:$0xff]
  %v433 = vld [vmem:[%s3 + $0x500] sm:$0xff]
  %v434 = vld [vmem:[%s3 + $0x508] sm:$0xff]
  %v435 = vld [vmem:[%s3 + $0x510] sm:$0xff]
  %v436 = vld [vmem:[%s3 + $0x518] sm:$0xff]
  %v437 = vld [vmem:[%s3 + $0x520] sm:$0xff]
  %v438 = vld [vmem:[%s3 + $0x528] sm:$0xff]
  %v439 = vld [vmem:[%s3 + $0x530] sm:$0xff]
  %v440 = vld [vmem:[%s3 + $0x538] sm:$0xff]
  %v441 = vld [vmem:[%s3 + $0x540] sm:$0xff]
  %v442 = vld [vmem:[%s3 + $0x548] sm:$0xff]
  %v443 = vld [vmem:[%s3 + $0x550] sm:$0xff]
  %v444 = vld [vmem:[%s3 + $0x558] sm:$0xff]
  %v445 = vld [vmem:[%s3 + $0x560] sm:$0xff]
  %v446 = vld [vmem:[%s3 + $0x568] sm:$0xff]
  %v447 = vld [vmem:[%s3 + $0x570] sm:$0xff]
  %v448 = vld [vmem:[%s3 + $0x578] sm:$0xff]
  %v449 = vld [vmem:[%s3 + $0x580] sm:$0xff]
  %v450 = vld [vmem:[%s3 + $0x588] sm:$0xff]
  %v451 = vld [vmem:[%s3 + $0x590] sm:$0xff]
  %v452 = vld [vmem:[%s3 + $0x598] sm:$0xff]
  %v453 = vld [vmem:[%s3 + $0x5a0] sm:$0xff]
  %v454 = vld [vmem:[%s3 + $0x5a8] sm:$0xff]
  %v455 = vld [vmem:[%s3 + $0x5b0] sm:$0xff]
  %v456 = vld [vmem:[%s3 + $0x5b8] sm:$0xff]
  %v457 = vld [vmem:[%s3 + $0x5c0] sm:$0xff]
  %v458 = vld [vmem:[%s3 + $0x5c8] sm:$0xff]
  %v459 = vld [vmem:[%s3 + $0x5d0] sm:$0xff]
  %v460 = vld [vmem:[%s3 + $0x5d8] sm:$0xff]
  %v461 = vld [vmem:[%s3 + $0x5e0] sm:$0xff]
  %v462 = vld [vmem:[%s3 + $0x5e8] sm:$0xff]
  %v463 = vld [vmem:[%s3 + $0x5f0] sm:$0xff]
  %v464 = vld [vmem:[%s3 + $0x5f8] sm:$0xff]
  %v465 = vld [vmem:[%s3 + $0x600] sm:$0xff]
  %v466 = vld [vmem:[%s3 + $0x608] sm:$0xff]
  %v467 = vld [vmem:[%s3 + $0x610] sm:$0xff]
  %v468 = vld [vmem:[%s3 + $0x618] sm:$0xff]
  %v469 = vld [vmem:[%s3 + $0x620] sm:$0xff]
  %v470 = vld [vmem:[%s3 + $0x628] sm:$0xff]
  %v471 = vld [vmem:[%s3 + $0x630] sm:$0xff]
  %v472 = vld [vmem:[%s3 + $0x638] sm:$0xff]
  %v473 = vld [vmem:[%s3 + $0x640] sm:$0xff]
  %v474 = vld [vmem:[%s3 + $0x648] sm:$0xff]
  %v475 = vld [vmem:[%s3 + $0x650] sm:$0xff]
  %v476 = vld [vmem:[%s3 + $0x658] sm:$0xff]
  %v477 = vld [vmem:[%s3 + $0x660] sm:$0xff]
  %v478 = vld [vmem:[%s3 + $0x668] sm:$0xff]
  %v479 = vld [vmem:[%s3 + $0x670] sm:$0xff]
  %v480 = vld [vmem:[%s3 + $0x678] sm:$0xff]
  %v481 = vld [vmem:[%s3 + $0x680] sm:$0xff]
  %v482 = vld [vmem:[%s3 + $0x688] sm:$0xff]
  %v483 = vld [vmem:[%s3 + $0x690] sm:$0xff]
  %v484 = vld [vmem:[%s3 + $0x698] sm:$0xff]
  %v485 = vld [vmem:[%s3 + $0x6a0] sm:$0xff]
  %v486 = vld [vmem:[%s3 + $0x6a8] sm:$0xff]
  %v487 = vld [vmem:[%s3 + $0x6b0] sm:$0xff]
  %v488 = vld [vmem:[%s3 + $0x6b8] sm:$0xff]
  %v489 = vld [vmem:[%s3 + $0x6c0] sm:$0xff]
  %v490 = vld [vmem:[%s3 + $0x6c8] sm:$0xff]
  %v491 = vld [vmem:[%s3 + $0x6d0] sm:$0xff]
  %v492 = vld [vmem:[%s3 + $0x6d8] sm:$0xff]
  %v493 = vld [vmem:[%s3 + $0x6e0] sm:$0xff]
  %v494 = vld [vmem:[%s3 + $0x6e8] sm:$0xff]
  %v495 = vld [vmem:[%s3 + $0x6f0] sm:$0xff]
  %v496 = vld [vmem:[%s3 + $0x6f8] sm:$0xff]
  %v497 = vld [vmem:[%s3 + $0x700] sm:$0xff]
  %v498 = vld [vmem:[%s3 + $0x708] sm:$0xff]
  %v499 = vld [vmem:[%s3 + $0x710] sm:$0xff]
  %v500 = vld [vmem:[%s3 + $0x718] sm:$0xff]
  %v501 = vld [vmem:[%s3 + $0x720] sm:$0xff]
  %v502 = vld [vmem:[%s3 + $0x728] sm:$0xff]
  %v503 = vld [vmem:[%s3 + $0x730] sm:$0xff]
  %v504 = vld [vmem:[%s3 + $0x738] sm:$0xff]
  %v505 = vld [vmem:[%s3 + $0x740] sm:$0xff]
  %v506 = vld [vmem:[%s3 + $0x748] sm:$0xff]
  %v507 = vld [vmem:[%s3 + $0x750] sm:$0xff]
  %v508 = vld [vmem:[%s3 + $0x758] sm:$0xff]
  %v509 = vld [vmem:[%s3 + $0x760] sm:$0xff]
  %v510 = vld [vmem:[%s3 + $0x768] sm:$0xff]
  %v511 = vld [vmem:[%s3 + $0x770] sm:$0xff]
  %v512 = vld [vmem:[%s3 + $0x778] sm:$0xff]
  %v513 = vld [vmem:[%s3 + $0x780] sm:$0xff]
  %v514 = vld [vmem:[%s3 + $0x788] sm:$0xff]
  %v515 = vld [vmem:[%s3 + $0x790] sm:$0xff]
  %v516 = vld [vmem:[%s3 + $0x798] sm:$0xff]
  %v517 = vld [vmem:[%s3 + $0x7a0] sm:$0xff]
  %v518 = vld [vmem:[%s3 + $0x7a8] sm:$0xff]
  %v519 = vld [vmem:[%s3 + $0x7b0] sm:$0xff]
  %v520 = vld [vmem:[%s3 + $0x7b8] sm:$0xff]
  %v521 = vld [vmem:[%s3 + $0x7c0] sm:$0xff]
  %v522 = vld [vmem:[%s3 + $0x7c8] sm:$0xff]
  %v523 = vld [vmem:[%s3 + $0x7d0] sm:$0xff]
  %v524 = vld [vmem:[%s3 + $0x7d8] sm:$0xff]
  %v525 = vld [vmem:[%s3 + $0x7e0] sm:$0xff]
  %v526 = vld [vmem:[%s3 + $0x7e8] sm:$0xff]
  %v527 = vld [vmem:[%s3 + $0x7f0] sm:$0xff]
  %v528 = vld [vmem:[%s3 + $0x7f8] sm:$0xff]
  %v529 = vld [vmem:[%s4] sm:$0xf]
  %v531 = vlaneseq
  %v532 = vshrl.u32 %v531, 7
  %v533 = vsub.s32 0, %v532
  %v534 = vrot.slane %v529, %v533
  %v535 = vlaneseq
  %v536 = vshrl.u32 %v535, 7
  %v537 = vsub.s32 1, %v536
  %v538 = vrot.slane %v529, %v537
  %v539 = vlaneseq
  %v540 = vshrl.u32 %v539, 7
  %v541 = vsub.s32 2, %v540
  %v542 = vrot.slane %v529, %v541
  %v543 = vlaneseq
  %v544 = vshrl.u32 %v543, 7
  %v545 = vsub.s32 3, %v544
  %v546 = vrot.slane %v529, %v545
  %551 = vmatprep.subr.mxu0 %v274
  %552 = vmatpush1.msra.mxu0 %v273
  %553 = vmatprep.subr.mxu0 %v278
  %554 = vmatpush1.msra.mxu0 %v277
  %555 = vmatprep.subr.mxu0 %v282
  %556 = vmatpush1.msra.mxu0 %v281
  %557 = vmatprep.subr.mxu0 %v286
  %558 = vmatpush1.msra.mxu0 %v285
  %559 = vmatprep.subr.mxu0 %v290
  %560 = vmatpush1.msra.mxu0 %v289
  %561 = vmatprep.subr.mxu0 %v294
  %562 = vmatpush1.msra.mxu0 %v293
  %563 = vmatprep.subr.mxu0 %v298
  %564 = vmatpush1.msra.mxu0 %v297
  %565 = vmatprep.subr.mxu0 %v302
  %566 = vmatpush1.msra.mxu0 %v301
  %567 = vmatprep.subr.mxu0 %v306
  %568 = vmatpush1.msra.mxu0 %v305
  %569 = vmatprep.subr.mxu0 %v310
  %570 = vmatpush1.msra.mxu0 %v309
  %571 = vmatprep.subr.mxu0 %v314
  %572 = vmatpush1.msra.mxu0 %v313
  %573 = vmatprep.subr.mxu0 %v318
  %574 = vmatpush1.msra.mxu0 %v317
  %575 = vmatprep.subr.mxu0 %v322
  %576 = vmatpush1.msra.mxu0 %v321
  %577 = vmatprep.subr.mxu0 %v326
  %578 = vmatpush1.msra.mxu0 %v325
  %579 = vmatprep.subr.mxu0 %v330
  %580 = vmatpush1.msra.mxu0 %v329
  %581 = vmatprep.subr.mxu0 %v334
  %582 = vmatpush1.msra.mxu0 %v333
  %583 = vmatprep.subr.mxu0 %v338
  %584 = vmatpush1.msra.mxu0 %v337
  %585 = vmatprep.subr.mxu0 %v342
  %586 = vmatpush1.msra.mxu0 %v341
  %587 = vmatprep.subr.mxu0 %v346
  %588 = vmatpush1.msra.mxu0 %v345
  %589 = vmatprep.subr.mxu0 %v350
  %590 = vmatpush1.msra.mxu0 %v349
  %591 = vmatprep.subr.mxu0 %v354
  %592 = vmatpush1.msra.mxu0 %v353
  %593 = vmatprep.subr.mxu0 %v358
  %594 = vmatpush1.msra.mxu0 %v357
  %595 = vmatprep.subr.mxu0 %v362
  %596 = vmatpush1.msra.mxu0 %v361
  %597 = vmatprep.subr.mxu0 %v366
  %598 = vmatpush1.msra.mxu0 %v365
  %599 = vmatprep.subr.mxu0 %v370
  %600 = vmatpush1.msra.mxu0 %v369
  %601 = vmatprep.subr.mxu0 %v374
  %602 = vmatpush1.msra.mxu0 %v373
  %603 = vmatprep.subr.mxu0 %v378
  %604 = vmatpush1.msra.mxu0 %v377
  %605 = vmatprep.subr.mxu0 %v382
  %606 = vmatpush1.msra.mxu0 %v381
  %607 = vmatprep.subr.mxu0 %v386
  %608 = vmatpush1.msra.mxu0 %v385
  %609 = vmatprep.subr.mxu0 %v390
  %610 = vmatpush1.msra.mxu0 %v389
  %611 = vmatprep.subr.mxu0 %v394
  %612 = vmatpush1.msra.mxu0 %v393
  %613 = vmatprep.subr.mxu0 %v398
  %614 = vmatpush1.msra.mxu0 %v397
  %615 = vmatprep.mubr.f32.mxu0 %v266
  %616 = vmatmul.mubr.f32.gmra.mrb[0].mxu0 %v265
  %v617 = vpop.f32.mrb[0].mxu0
  %v618 = vadd.f32 %v534, %v617
  %v619 = vpop.f32.mrb[0].mxu0
  %v620 = vadd.f32 %v538, %v619
  %621 = vmatprep.mubr.f32.mxu0 %v270
  %622 = vmatmul.mubr.f32.gmra.mrb[0].mxu0 %v269
  %v623 = vpop.f32.mrb[0].mxu0
  %v624 = vadd.f32 %v534, %v623
  %v625 = vpop.f32.mrb[0].mxu0
  %v626 = vadd.f32 %v538, %v625
  %627 = vdwg.mxu0
  %628 = vmatprep.subr.mxu0 %v402
  %629 = vmatpush1.msra.mxu0 %v401
  %630 = vmatprep.subr.mxu0 %v406
  %631 = vmatpush1.msra.mxu0 %v405
  %632 = vmatprep.subr.mxu0 %v410
  %633 = vmatpush1.msra.mxu0 %v409
  %634 = vmatprep.subr.mxu0 %v414
  %635 = vmatpush1.msra.mxu0 %v413
  %636 = vmatprep.subr.mxu0 %v418
  %637 = vmatpush1.msra.mxu0 %v417
  %638 = vmatprep.subr.mxu0 %v422
  %639 = vmatpush1.msra.mxu0 %v421
  %640 = vmatprep.subr.mxu0 %v426
  %641 = vmatpush1.msra.mxu0 %v425
  %642 = vmatprep.subr.mxu0 %v430
  %643 = vmatpush1.msra.mxu0 %v429
  %644 = vmatprep.subr.mxu0 %v434
  %645 = vmatpush1.msra.mxu0 %v433
  %646 = vmatprep.subr.mxu0 %v438
  %647 = vmatpush1.msra.mxu0 %v437
  %648 = vmatprep.subr.mxu0 %v442
  %649 = vmatpush1.msra.mxu0 %v441
  %650 = vmatprep.subr.mxu0 %v446
  %651 = vmatpush1.msra.mxu0 %v445
  %652 = vmatprep.subr.mxu0 %v450
  %653 = vmatpush1.msra.mxu0 %v449
  %654 = vmatprep.subr.mxu0 %v454
  %655 = vmatpush1.msra.mxu0 %v453
  %656 = vmatprep.subr.mxu0 %v458
  %657 = vmatpush1.msra.mxu0 %v457
  %658 = vmatprep.subr.mxu0 %v462
  %659 = vmatpush1.msra.mxu0 %v461
  %660 = vmatprep.subr.mxu0 %v466
  %661 = vmatpush1.msra.mxu0 %v465
  %662 = vmatprep.subr.mxu0 %v470
  %663 = vmatpush1.msra.mxu0 %v469
  %664 = vmatprep.subr.mxu0 %v474
  %665 = vmatpush1.msra.mxu0 %v473
  %666 = vmatprep.subr.mxu0 %v478
  %667 = vmatpush1.msra.mxu0 %v477
  %668 = vmatprep.subr.mxu0 %v482
  %669 = vmatpush1.msra.mxu0 %v481
  %670 = vmatprep.subr.mxu0 %v486
  %671 = vmatpush1.msra.mxu0 %v485
  %672 = vmatprep.subr.mxu0 %v490
  %673 = vmatpush1.msra.mxu0 %v489
  %674 = vmatprep.subr.mxu0 %v494
  %675 = vmatpush1.msra.mxu0 %v493
  %676 = vmatprep.subr.mxu0 %v498
  %677 = vmatpush1.msra.mxu0 %v497
  %678 = vmatprep.subr.mxu0 %v502
  %679 = vmatpush1.msra.mxu0 %v501
  %680 = vmatprep.subr.mxu0 %v506
  %681 = vmatpush1.msra.mxu0 %v505
  %682 = vmatprep.subr.mxu0 %v510
  %683 = vmatpush1.msra.mxu0 %v509
  %684 = vmatprep.subr.mxu0 %v514
  %685 = vmatpush1.msra.mxu0 %v513
  %686 = vmatprep.subr.mxu0 %v518
  %687 = vmatpush1.msra.mxu0 %v517
  %688 = vmatprep.subr.mxu0 %v522
  %689 = vmatpush1.msra.mxu0 %v521
  %690 = vmatprep.subr.mxu0 %v526
  %691 = vmatpush1.msra.mxu0 %v525
  %692 = vmatprep.mubr.f32.mxu0 %v268
  %693 = vmatmul.mubr.f32.gmra.mrb[0].mxu0 %v267
  %v694 = vpop.f32.mrb[0].mxu0
  %v695 = vadd.f32 %v618, %v694
  %v696 = vpop.f32.mrb[0].mxu0
  %v697 = vadd.f32 %v620, %v696
  %698 = vmatprep.mubr.f32.mxu0 %v272
  %699 = vmatmul.mubr.f32.gmra.mrb[0].mxu0 %v271
  %v700 = vpop.f32.mrb[0].mxu0
  %v701 = vadd.f32 %v624, %v700
  %v702 = vpop.f32.mrb[0].mxu0
  %v703 = vadd.f32 %v626, %v702
  %704 = vdwg.mxu0
  %705 = vmatprep.subr.mxu0 %v276
  %706 = vmatpush1.msra.mxu0 %v275
  %707 = vmatprep.subr.mxu0 %v280
  %708 = vmatpush1.msra.mxu0 %v279
  %709 = vmatprep.subr.mxu0 %v284
  %710 = vmatpush1.msra.mxu0 %v283
  %711 = vmatprep.subr.mxu0 %v288
  %712 = vmatpush1.msra.mxu0 %v287
  %713 = vmatprep.subr.mxu0 %v292
  %714 = vmatpush1.msra.mxu0 %v291
  %715 = vmatprep.subr.mxu0 %v296
  %716 = vmatpush1.msra.mxu0 %v295
  %717 = vmatprep.subr.mxu0 %v300
  %718 = vmatpush1.msra.mxu0 %v299
  %719 = vmatprep.subr.mxu0 %v304
  %720 = vmatpush1.msra.mxu0 %v303
  %721 = vmatprep.subr.mxu0 %v308
  %722 = vmatpush1.msra.mxu0 %v307
  %723 = vmatprep.subr.mxu0 %v312
  %724 = vmatpush1.msra.mxu0 %v311
  %725 = vmatprep.subr.mxu0 %v316
  %726 = vmatpush1.msra.mxu0 %v315
  %727 = vmatprep.subr.mxu0 %v320
  %728 = vmatpush1.msra.mxu0 %v319
  %729 = vmatprep.subr.mxu0 %v324
  %730 = vmatpush1.msra.mxu0 %v323
  %731 = vmatprep.subr.mxu0 %v328
  %732 = vmatpush1.msra.mxu0 %v327
  %733 = vmatprep.subr.mxu0 %v332
  %734 = vmatpush1.msra.mxu0 %v331
  %735 = vmatprep.subr.mxu0 %v336
  %736 = vmatpush1.msra.mxu0 %v335
  %737 = vmatprep.subr.mxu0 %v340
  %738 = vmatpush1.msra.mxu0 %v339
  %739 = vmatprep.subr.mxu0 %v344
  %740 = vmatpush1.msra.mxu0 %v343
  %741 = vmatprep.subr.mxu0 %v348
  %742 = vmatpush1.msra.mxu0 %v347
  %743 = vmatprep.subr.mxu0 %v352
  %744 = vmatpush1.msra.mxu0 %v351
  %745 = vmatprep.subr.mxu0 %v356
  %746 = vmatpush1.msra.mxu0 %v355
  %747 = vmatprep.subr.mxu0 %v360
  %748 = vmatpush1.msra.mxu0 %v359
  %749 = vmatprep.subr.mxu0 %v364
  %750 = vmatpush1.msra.mxu0 %v363
  %751 = vmatprep.subr.mxu0 %v368
  %752 = vmatpush1.msra.mxu0 %v367
  %753 = vmatprep.subr.mxu0 %v372
  %754 = vmatpush1.msra.mxu0 %v371
  %755 = vmatprep.subr.mxu0 %v376
  %756 = vmatpush1.msra.mxu0 %v375
  %757 = vmatprep.subr.mxu0 %v380
  %758 = vmatpush1.msra.mxu0 %v379
  %759 = vmatprep.subr.mxu0 %v384
  %760 = vmatpush1.msra.mxu0 %v383
  %761 = vmatprep.subr.mxu0 %v388
  %762 = vmatpush1.msra.mxu0 %v387
  %763 = vmatprep.subr.mxu0 %v392
  %764 = vmatpush1.msra.mxu0 %v391
  %765 = vmatprep.subr.mxu0 %v396
  %766 = vmatpush1.msra.mxu0 %v395
  %767 = vmatprep.subr.mxu0 %v400
  %768 = vmatpush1.msra.mxu0 %v399
  %769 = vmatprep.mubr.f32.mxu0 %v266
  %770 = vmatmul.mubr.f32.gmra.mrb[0].mxu0 %v265
  %v771 = vpop.f32.mrb[0].mxu0
  %v772 = vadd.f32 %v542, %v771
  %v773 = vpop.f32.mrb[0].mxu0
  %v774 = vadd.f32 %v546, %v773
  %775 = vmatprep.mubr.f32.mxu0 %v270
  %776 = vmatmul.mubr.f32.gmra.mrb[0].mxu0 %v269
  %v777 = vpop.f32.mrb[0].mxu0
  %v778 = vadd.f32 %v542, %v777
  %v779 = vpop.f32.mrb[0].mxu0
  %v780 = vadd.f32 %v546, %v779
  %781 = vdwg.mxu0
  %782 = vmatprep.subr.mxu0 %v404
  %783 = vmatpush1.msra.mxu0 %v403
  %784 = vmatprep.subr.mxu0 %v408
  %785 = vmatpush1.msra.mxu0 %v407
  %786 = vmatprep.subr.mxu0 %v412
  %787 = vmatpush1.msra.mxu0 %v411
  %788 = vmatprep.subr.mxu0 %v416
  %789 = vmatpush1.msra.mxu0 %v415
  %790 = vmatprep.subr.mxu0 %v420
  %791 = vmatpush1.msra.mxu0 %v419
  %792 = vmatprep.subr.mxu0 %v424
  %793 = vmatpush1.msra.mxu0 %v423
  %794 = vmatprep.subr.mxu0 %v428
  %795 = vmatpush1.msra.mxu0 %v427
  %796 = vmatprep.subr.mxu0 %v432
  %797 = vmatpush1.msra.mxu0 %v431
  %798 = vmatprep.subr.mxu0 %v436
  %799 = vmatpush1.msra.mxu0 %v435
  %800 = vmatprep.subr.mxu0 %v440
  %801 = vmatpush1.msra.mxu0 %v439
  %802 = vmatprep.subr.mxu0 %v444
  %803 = vmatpush1.msra.mxu0 %v443
  %804 = vmatprep.subr.mxu0 %v448
  %805 = vmatpush1.msra.mxu0 %v447
  %806 = vmatprep.subr.mxu0 %v452
  %807 = vmatpush1.msra.mxu0 %v451
  %808 = vmatprep.subr.mxu0 %v456
  %809 = vmatpush1.msra.mxu0 %v455
  %810 = vmatprep.subr.mxu0 %v460
  %811 = vmatpush1.msra.mxu0 %v459
  %812 = vmatprep.subr.mxu0 %v464
  %813 = vmatpush1.msra.mxu0 %v463
  %814 = vmatprep.subr.mxu0 %v468
  %815 = vmatpush1.msra.mxu0 %v467
  %816 = vmatprep.subr.mxu0 %v472
  %817 = vmatpush1.msra.mxu0 %v471
  %818 = vmatprep.subr.mxu0 %v476
  %819 = vmatpush1.msra.mxu0 %v475
  %820 = vmatprep.subr.mxu0 %v480
  %821 = vmatpush1.msra.mxu0 %v479
  %822 = vmatprep.subr.mxu0 %v484
  %823 = vmatpush1.msra.mxu0 %v483
  %824 = vmatprep.subr.mxu0 %v488
  %825 = vmatpush1.msra.mxu0 %v487
  %826 = vmatprep.subr.mxu0 %v492
  %827 = vmatpush1.msra.mxu0 %v491
  %828 = vmatprep.subr.mxu0 %v496
  %829 = vmatpush1.msra.mxu0 %v495
  %830 = vmatprep.subr.mxu0 %v500
  %831 = vmatpush1.msra.mxu0 %v499
  %832 = vmatprep.subr.mxu0 %v504
  %833 = vmatpush1.msra.mxu0 %v503
  %834 = vmatprep.subr.mxu0 %v508
  %835 = vmatpush1.msra.mxu0 %v507
  %836 = vmatprep.subr.mxu0 %v512
  %837 = vmatpush1.msra.mxu0 %v511
  %838 = vmatprep.subr.mxu0 %v516
  %839 = vmatpush1.msra.mxu0 %v515
  %840 = vmatprep.subr.mxu0 %v520
  %841 = vmatpush1.msra.mxu0 %v519
  %842 = vmatprep.subr.mxu0 %v524
  %843 = vmatpush1.msra.mxu0 %v523
  %844 = vmatprep.subr.mxu0 %v528
  %845 = vmatpush1.msra.mxu0 %v527
  %846 = vmatprep.mubr.f32.mxu0 %v268
  %847 = vmatmul.mubr.f32.gmra.mrb[0].mxu0 %v267
  %v848 = vpop.f32.mrb[0].mxu0
  %v849 = vadd.f32 %v772, %v848
  %v850 = vpop.f32.mrb[0].mxu0
  %v851 = vadd.f32 %v774, %v850
  %852 = vmatprep.mubr.f32.mxu0 %v272
  %853 = vmatmul.mubr.f32.gmra.mrb[0].mxu0 %v271
  %v854 = vpop.f32.mrb[0].mxu0
  %v855 = vadd.f32 %v778, %v854
  %v856 = vpop.f32.mrb[0].mxu0
  %v857 = vadd.f32 %v780, %v856
  %858 = vdwg.mxu0
  %v859 = vmax.f32 %v695, 0.0
  %v860 = vmax.f32 %v697, 0.0
  %v861 = vmax.f32 %v849, 0.0
  %v862 = vmax.f32 %v851, 0.0
  %v863 = vmax.f32 %v701, 0.0
  %v864 = vmax.f32 %v703, 0.0
  %v865 = vmax.f32 %v855, 0.0
  %v866 = vmax.f32 %v857, 0.0
  %867 = vst [vmem:[#allocation3] sm:$0xff] %v859
  %868 = vst [vmem:[#allocation3 + $0x8] sm:$0xff] %v860
  %869 = vst [vmem:[#allocation3 + $0x10] sm:$0xff] %v861
  %870 = vst [vmem:[#allocation3 + $0x18] sm:$0xff] %v862
  %871 = vst [vmem:[#allocation3 + $0x20] sm:$0xff] %v863
  %872 = vst [vmem:[#allocation3 + $0x28] sm:$0xff] %v864
  %873 = vst [vmem:[#allocation3 + $0x30] sm:$0xff] %v865
  %874 = vst [vmem:[#allocation3 + $0x38] sm:$0xff] %v866
  %v875 = vld [vmem:[#allocation3] sm:$0xff]
  %v876 = vld [vmem:[#allocation3 + $0x8] sm:$0xff]
  %v877 = vld [vmem:[#allocation3 + $0x10] sm:$0xff]
  %v878 = vld [vmem:[#allocation3 + $0x18] sm:$0xff]
  %v879 = vld [vmem:[#allocation3 + $0x20] sm:$0xff]
  %v880 = vld [vmem:[#allocation3 + $0x28] sm:$0xff]
  %v881 = vld [vmem:[#allocation3 + $0x30] sm:$0xff]
  %v882 = vld [vmem:[#allocation3 + $0x38] sm:$0xff]
  %v883 = vld [vmem:[%s5] sm:$0xff]
  %v884 = vld [vmem:[%s5 + $0x8] sm:$0xff]
  %v885 = vld [vmem:[%s5 + $0x10] sm:$0xff]
  %v886 = vld [vmem:[%s5 + $0x18] sm:$0xff]
  %v887 = vld [vmem:[%s5 + $0x20] sm:$0xff]
  %v888 = vld [vmem:[%s5 + $0x28] sm:$0xff]
  %v889 = vld [vmem:[%s5 + $0x30] sm:$0xff]
  %v890 = vld [vmem:[%s5 + $0x38] sm:$0xff]
  %v891 = vld [vmem:[%s5 + $0x40] sm:$0xff]
  %v892 = vld [vmem:[%s5 + $0x48] sm:$0xff]
  %v893 = vld [vmem:[%s5 + $0x50] sm:$0xff]
  %v894 = vld [vmem:[%s5 + $0x58] sm:$0xff]
  %v895 = vld [vmem:[%s5 + $0x60] sm:$0xff]
  %v896 = vld [vmem:[%s5 + $0x68] sm:$0xff]
  %v897 = vld [vmem:[%s5 + $0x70] sm:$0xff]
  %v898 = vld [vmem:[%s5 + $0x78] sm:$0xff]
  %v899 = vld [vmem:[%s5 + $0x80] sm:$0xff]
  %v900 = vld [vmem:[%s5 + $0x88] sm:$0xff]
  %v901 = vld [vmem:[%s5 + $0x90] sm:$0xff]
  %v902 = vld [vmem:[%s5 + $0x98] sm:$0xff]
  %v903 = vld [vmem:[%s5 + $0xa0] sm:$0xff]
  %v904 = vld [vmem:[%s5 + $0xa8] sm:$0xff]
  %v905 = vld [vmem:[%s5 + $0xb0] sm:$0xff]
  %v906 = vld [vmem:[%s5 + $0xb8] sm:$0xff]
  %v907 = vld [vmem:[%s5 + $0xc0] sm:$0xff]
  %v908 = vld [vmem:[%s5 + $0xc8] sm:$0xff]
  %v909 = vld [vmem:[%s5 + $0xd0] sm:$0xff]
  %v910 = vld [vmem:[%s5 + $0xd8] sm:$0xff]
  %v911 = vld [vmem:[%s5 + $0xe0] sm:$0xff]
  %v912 = vld [vmem:[%s5 + $0xe8] sm:$0xff]
  %v913 = vld [vmem:[%s5 + $0xf0] sm:$0xff]
  %v914 = vld [vmem:[%s5 + $0xf8] sm:$0xff]
  %v915 = vld [vmem:[%s5 + $0x100] sm:$0xff]
  %v916 = vld [vmem:[%s5 + $0x108] sm:$0xff]
  %v917 = vld [vmem:[%s5 + $0x110] sm:$0xff]
  %v918 = vld [vmem:[%s5 + $0x118] sm:$0xff]
  %v919 = vld [vmem:[%s5 + $0x120] sm:$0xff]
  %v920 = vld [vmem:[%s5 + $0x128] sm:$0xff]
  %v921 = vld [vmem:[%s5 + $0x130] sm:$0xff]
  %v922 = vld [vmem:[%s5 + $0x138] sm:$0xff]
  %v923 = vld [vmem:[%s5 + $0x140] sm:$0xff]
  %v924 = vld [vmem:[%s5 + $0x148] sm:$0xff]
  %v925 = vld [vmem:[%s5 + $0x150] sm:$0xff]
  %v926 = vld [vmem:[%s5 + $0x158] sm:$0xff]
  %v927 = vld [vmem:[%s5 + $0x160] sm:$0xff]
  %v928 = vld [vmem:[%s5 + $0x168] sm:$0xff]
  %v929 = vld [vmem:[%s5 + $0x170] sm:$0xff]
  %v930 = vld [vmem:[%s5 + $0x178] sm:$0xff]
  %v931 = vld [vmem:[%s5 + $0x180] sm:$0xff]
  %v932 = vld [vmem:[%s5 + $0x188] sm:$0xff]
  %v933 = vld [vmem:[%s5 + $0x190] sm:$0xff]
  %v934 = vld [vmem:[%s5 + $0x198] sm:$0xff]
  %v935 = vld [vmem:[%s5 + $0x1a0] sm:$0xff]
  %v936 = vld [vmem:[%s5 + $0x1a8] sm:$0xff]
  %v937 = vld [vmem:[%s5 + $0x1b0] sm:$0xff]
  %v938 = vld [vmem:[%s5 + $0x1b8] sm:$0xff]
  %v939 = vld [vmem:[%s5 + $0x1c0] sm:$0xff]
  %v940 = vld [vmem:[%s5 + $0x1c8] sm:$0xff]
  %v941 = vld [vmem:[%s5 + $0x1d0] sm:$0xff]
  %v942 = vld [vmem:[%s5 + $0x1d8] sm:$0xff]
  %v943 = vld [vmem:[%s5 + $0x1e0] sm:$0xff]
  %v944 = vld [vmem:[%s5 + $0x1e8] sm:$0xff]
  %v945 = vld [vmem:[%s5 + $0x1f0] sm:$0xff]
  %v946 = vld [vmem:[%s5 + $0x1f8] sm:$0xff]
  %v947 = vld [vmem:[%s5 + $0x200] sm:$0xff]
  %v948 = vld [vmem:[%s5 + $0x208] sm:$0xff]
  %v949 = vld [vmem:[%s5 + $0x210] sm:$0xff]
  %v950 = vld [vmem:[%s5 + $0x218] sm:$0xff]
  %v951 = vld [vmem:[%s5 + $0x220] sm:$0xff]
  %v952 = vld [vmem:[%s5 + $0x228] sm:$0xff]
  %v953 = vld [vmem:[%s5 + $0x230] sm:$0xff]
  %v954 = vld [vmem:[%s5 + $0x238] sm:$0xff]
  %v955 = vld [vmem:[%s5 + $0x240] sm:$0xff]
  %v956 = vld [vmem:[%s5 + $0x248] sm:$0xff]
  %v957 = vld [vmem:[%s5 + $0x250] sm:$0xff]
  %v958 = vld [vmem:[%s5 + $0x258] sm:$0xff]
  %v959 = vld [vmem:[%s5 + $0x260] sm:$0xff]
  %v960 = vld [vmem:[%s5 + $0x268] sm:$0xff]
  %v961 = vld [vmem:[%s5 + $0x270] sm:$0xff]
  %v962 = vld [vmem:[%s5 + $0x278] sm:$0xff]
  %v963 = vld [vmem:[%s5 + $0x280] sm:$0xff]
  %v964 = vld [vmem:[%s5 + $0x288] sm:$0xff]
  %v965 = vld [vmem:[%s5 + $0x290] sm:$0xff]
  %v966 = vld [vmem:[%s5 + $0x298] sm:$0xff]
  %v967 = vld [vmem:[%s5 + $0x2a0] sm:$0xff]
  %v968 = vld [vmem:[%s5 + $0x2a8] sm:$0xff]
  %v969 = vld [vmem:[%s5 + $0x2b0] sm:$0xff]
  %v970 = vld [vmem:[%s5 + $0x2b8] sm:$0xff]
  %v971 = vld [vmem:[%s5 + $0x2c0] sm:$0xff]
  %v972 = vld [vmem:[%s5 + $0x2c8] sm:$0xff]
  %v973 = vld [vmem:[%s5 + $0x2d0] sm:$0xff]
  %v974 = vld [vmem:[%s5 + $0x2d8] sm:$0xff]
  %v975 = vld [vmem:[%s5 + $0x2e0] sm:$0xff]
  %v976 = vld [vmem:[%s5 + $0x2e8] sm:$0xff]
  %v977 = vld [vmem:[%s5 + $0x2f0] sm:$0xff]
  %v978 = vld [vmem:[%s5 + $0x2f8] sm:$0xff]
  %v979 = vld [vmem:[%s5 + $0x300] sm:$0xff]
  %v980 = vld [vmem:[%s5 + $0x308] sm:$0xff]
  %v981 = vld [vmem:[%s5 + $0x310] sm:$0xff]
  %v982 = vld [vmem:[%s5 + $0x318] sm:$0xff]
  %v983 = vld [vmem:[%s5 + $0x320] sm:$0xff]
  %v984 = vld [vmem:[%s5 + $0x328] sm:$0xff]
  %v985 = vld [vmem:[%s5 + $0x330] sm:$0xff]
  %v986 = vld [vmem:[%s5 + $0x338] sm:$0xff]
  %v987 = vld [vmem:[%s5 + $0x340] sm:$0xff]
  %v988 = vld [vmem:[%s5 + $0x348] sm:$0xff]
  %v989 = vld [vmem:[%s5 + $0x350] sm:$0xff]
  %v990 = vld [vmem:[%s5 + $0x358] sm:$0xff]
  %v991 = vld [vmem:[%s5 + $0x360] sm:$0xff]
  %v992 = vld [vmem:[%s5 + $0x368] sm:$0xff]
  %v993 = vld [vmem:[%s5 + $0x370] sm:$0xff]
  %v994 = vld [vmem:[%s5 + $0x378] sm:$0xff]
  %v995 = vld [vmem:[%s5 + $0x380] sm:$0xff]
  %v996 = vld [vmem:[%s5 + $0x388] sm:$0xff]
  %v997 = vld [vmem:[%s5 + $0x390] sm:$0xff]
  %v998 = vld [vmem:[%s5 + $0x398] sm:$0xff]
  %v999 = vld [vmem:[%s5 + $0x3a0] sm:$0xff]
  %v1000 = vld [vmem:[%s5 + $0x3a8] sm:$0xff]
  %v1001 = vld [vmem:[%s5 + $0x3b0] sm:$0xff]
  %v1002 = vld [vmem:[%s5 + $0x3b8] sm:$0xff]
  %v1003 = vld [vmem:[%s5 + $0x3c0] sm:$0xff]
  %v1004 = vld [vmem:[%s5 + $0x3c8] sm:$0xff]
  %v1005 = vld [vmem:[%s5 + $0x3d0] sm:$0xff]
  %v1006 = vld [vmem:[%s5 + $0x3d8] sm:$0xff]
  %v1007 = vld [vmem:[%s5 + $0x3e0] sm:$0xff]
  %v1008 = vld [vmem:[%s5 + $0x3e8] sm:$0xff]
  %v1009 = vld [vmem:[%s5 + $0x3f0] sm:$0xff]
  %v1010 = vld [vmem:[%s5 + $0x3f8] sm:$0xff]
  %v1011 = vld [vmem:[%s5 + $0x400] sm:$0xff]
  %v1012 = vld [vmem:[%s5 + $0x408] sm:$0xff]
  %v1013 = vld [vmem:[%s5 + $0x410] sm:$0xff]
  %v1014 = vld [vmem:[%s5 + $0x418] sm:$0xff]
  %v1015 = vld [vmem:[%s5 + $0x420] sm:$0xff]
  %v1016 = vld [vmem:[%s5 + $0x428] sm:$0xff]
  %v1017 = vld [vmem:[%s5 + $0x430] sm:$0xff]
  %v1018 = vld [vmem:[%s5 + $0x438] sm:$0xff]
  %v1019 = vld [vmem:[%s5 + $0x440] sm:$0xff]
  %v1020 = vld [vmem:[%s5 + $0x448] sm:$0xff]
  %v1021 = vld [vmem:[%s5 + $0x450] sm:$0xff]
  %v1022 = vld [vmem:[%s5 + $0x458] sm:$0xff]
  %v1023 = vld [vmem:[%s5 + $0x460] sm:$0xff]
  %v1024 = vld [vmem:[%s5 + $0x468] sm:$0xff]
  %v1025 = vld [vmem:[%s5 + $0x470] sm:$0xff]
  %v1026 = vld [vmem:[%s5 + $0x478] sm:$0xff]
  %v1027 = vld [vmem:[%s5 + $0x480] sm:$0xff]
  %v1028 = vld [vmem:[%s5 + $0x488] sm:$0xff]
  %v1029 = vld [vmem:[%s5 + $0x490] sm:$0xff]
  %v1030 = vld [vmem:[%s5 + $0x498] sm:$0xff]
  %v1031 = vld [vmem:[%s5 + $0x4a0] sm:$0xff]
  %v1032 = vld [vmem:[%s5 + $0x4a8] sm:$0xff]
  %v1033 = vld [vmem:[%s5 + $0x4b0] sm:$0xff]
  %v1034 = vld [vmem:[%s5 + $0x4b8] sm:$0xff]
  %v1035 = vld [vmem:[%s5 + $0x4c0] sm:$0xff]
  %v1036 = vld [vmem:[%s5 + $0x4c8] sm:$0xff]
  %v1037 = vld [vmem:[%s5 + $0x4d0] sm:$0xff]
  %v1038 = vld [vmem:[%s5 + $0x4d8] sm:$0xff]
  %v1039 = vld [vmem:[%s5 + $0x4e0] sm:$0xff]
  %v1040 = vld [vmem:[%s5 + $0x4e8] sm:$0xff]
  %v1041 = vld [vmem:[%s5 + $0x4f0] sm:$0xff]
  %v1042 = vld [vmem:[%s5 + $0x4f8] sm:$0xff]
  %v1043 = vld [vmem:[%s5 + $0x500] sm:$0xff]
  %v1044 = vld [vmem:[%s5 + $0x508] sm:$0xff]
  %v1045 = vld [vmem:[%s5 + $0x510] sm:$0xff]
  %v1046 = vld [vmem:[%s5 + $0x518] sm:$0xff]
  %v1047 = vld [vmem:[%s5 + $0x520] sm:$0xff]
  %v1048 = vld [vmem:[%s5 + $0x528] sm:$0xff]
  %v1049 = vld [vmem:[%s5 + $0x530] sm:$0xff]
  %v1050 = vld [vmem:[%s5 + $0x538] sm:$0xff]
  %v1051 = vld [vmem:[%s5 + $0x540] sm:$0xff]
  %v1052 = vld [vmem:[%s5 + $0x548] sm:$0xff]
  %v1053 = vld [vmem:[%s5 + $0x550] sm:$0xff]
  %v1054 = vld [vmem:[%s5 + $0x558] sm:$0xff]
  %v1055 = vld [vmem:[%s5 + $0x560] sm:$0xff]
  %v1056 = vld [vmem:[%s5 + $0x568] sm:$0xff]
  %v1057 = vld [vmem:[%s5 + $0x570] sm:$0xff]
  %v1058 = vld [vmem:[%s5 + $0x578] sm:$0xff]
  %v1059 = vld [vmem:[%s5 + $0x580] sm:$0xff]
  %v1060 = vld [vmem:[%s5 + $0x588] sm:$0xff]
  %v1061 = vld [vmem:[%s5 + $0x590] sm:$0xff]
  %v1062 = vld [vmem:[%s5 + $0x598] sm:$0xff]
  %v1063 = vld [vmem:[%s5 + $0x5a0] sm:$0xff]
  %v1064 = vld [vmem:[%s5 + $0x5a8] sm:$0xff]
  %v1065 = vld [vmem:[%s5 + $0x5b0] sm:$0xff]
  %v1066 = vld [vmem:[%s5 + $0x5b8] sm:$0xff]
  %v1067 = vld [vmem:[%s5 + $0x5c0] sm:$0xff]
  %v1068 = vld [vmem:[%s5 + $0x5c8] sm:$0xff]
  %v1069 = vld [vmem:[%s5 + $0x5d0] sm:$0xff]
  %v1070 = vld [vmem:[%s5 + $0x5d8] sm:$0xff]
  %v1071 = vld [vmem:[%s5 + $0x5e0] sm:$0xff]
  %v1072 = vld [vmem:[%s5 + $0x5e8] sm:$0xff]
  %v1073 = vld [vmem:[%s5 + $0x5f0] sm:$0xff]
  %v1074 = vld [vmem:[%s5 + $0x5f8] sm:$0xff]
  %v1075 = vld [vmem:[%s5 + $0x600] sm:$0xff]
  %v1076 = vld [vmem:[%s5 + $0x608] sm:$0xff]
  %v1077 = vld [vmem:[%s5 + $0x610] sm:$0xff]
  %v1078 = vld [vmem:[%s5 + $0x618] sm:$0xff]
  %v1079 = vld [vmem:[%s5 + $0x620] sm:$0xff]
  %v1080 = vld [vmem:[%s5 + $0x628] sm:$0xff]
  %v1081 = vld [vmem:[%s5 + $0x630] sm:$0xff]
  %v1082 = vld [vmem:[%s5 + $0x638] sm:$0xff]
  %v1083 = vld [vmem:[%s5 + $0x640] sm:$0xff]
  %v1084 = vld [vmem:[%s5 + $0x648] sm:$0xff]
  %v1085 = vld [vmem:[%s5 + $0x650] sm:$0xff]
  %v1086 = vld [vmem:[%s5 + $0x658] sm:$0xff]
  %v1087 = vld [vmem:[%s5 + $0x660] sm:$0xff]
  %v1088 = vld [vmem:[%s5 + $0x668] sm:$0xff]
  %v1089 = vld [vmem:[%s5 + $0x670] sm:$0xff]
  %v1090 = vld [vmem:[%s5 + $0x678] sm:$0xff]
  %v1091 = vld [vmem:[%s5 + $0x680] sm:$0xff]
  %v1092 = vld [vmem:[%s5 + $0x688] sm:$0xff]
  %v1093 = vld [vmem:[%s5 + $0x690] sm:$0xff]
  %v1094 = vld [vmem:[%s5 + $0x698] sm:$0xff]
  %v1095 = vld [vmem:[%s5 + $0x6a0] sm:$0xff]
  %v1096 = vld [vmem:[%s5 + $0x6a8] sm:$0xff]
  %v1097 = vld [vmem:[%s5 + $0x6b0] sm:$0xff]
  %v1098 = vld [vmem:[%s5 + $0x6b8] sm:$0xff]
  %v1099 = vld [vmem:[%s5 + $0x6c0] sm:$0xff]
  %v1100 = vld [vmem:[%s5 + $0x6c8] sm:$0xff]
  %v1101 = vld [vmem:[%s5 + $0x6d0] sm:$0xff]
  %v1102 = vld [vmem:[%s5 + $0x6d8] sm:$0xff]
  %v1103 = vld [vmem:[%s5 + $0x6e0] sm:$0xff]
  %v1104 = vld [vmem:[%s5 + $0x6e8] sm:$0xff]
  %v1105 = vld [vmem:[%s5 + $0x6f0] sm:$0xff]
  %v1106 = vld [vmem:[%s5 + $0x6f8] sm:$0xff]
  %v1107 = vld [vmem:[%s5 + $0x700] sm:$0xff]
  %v1108 = vld [vmem:[%s5 + $0x708] sm:$0xff]
  %v1109 = vld [vmem:[%s5 + $0x710] sm:$0xff]
  %v1110 = vld [vmem:[%s5 + $0x718] sm:$0xff]
  %v1111 = vld [vmem:[%s5 + $0x720] sm:$0xff]
  %v1112 = vld [vmem:[%s5 + $0x728] sm:$0xff]
  %v1113 = vld [vmem:[%s5 + $0x730] sm:$0xff]
  %v1114 = vld [vmem:[%s5 + $0x738] sm:$0xff]
  %v1115 = vld [vmem:[%s5 + $0x740] sm:$0xff]
  %v1116 = vld [vmem:[%s5 + $0x748] sm:$0xff]
  %v1117 = vld [vmem:[%s5 + $0x750] sm:$0xff]
  %v1118 = vld [vmem:[%s5 + $0x758] sm:$0xff]
  %v1119 = vld [vmem:[%s5 + $0x760] sm:$0xff]
  %v1120 = vld [vmem:[%s5 + $0x768] sm:$0xff]
  %v1121 = vld [vmem:[%s5 + $0x770] sm:$0xff]
  %v1122 = vld [vmem:[%s5 + $0x778] sm:$0xff]
  %v1123 = vld [vmem:[%s5 + $0x780] sm:$0xff]
  %v1124 = vld [vmem:[%s5 + $0x788] sm:$0xff]
  %v1125 = vld [vmem:[%s5 + $0x790] sm:$0xff]
  %v1126 = vld [vmem:[%s5 + $0x798] sm:$0xff]
  %v1127 = vld [vmem:[%s5 + $0x7a0] sm:$0xff]
  %v1128 = vld [vmem:[%s5 + $0x7a8] sm:$0xff]
  %v1129 = vld [vmem:[%s5 + $0x7b0] sm:$0xff]
  %v1130 = vld [vmem:[%s5 + $0x7b8] sm:$0xff]
  %v1131 = vld [vmem:[%s5 + $0x7c0] sm:$0xff]
  %v1132 = vld [vmem:[%s5 + $0x7c8] sm:$0xff]
  %v1133 = vld [vmem:[%s5 + $0x7d0] sm:$0xff]
  %v1134 = vld [vmem:[%s5 + $0x7d8] sm:$0xff]
  %v1135 = vld [vmem:[%s5 + $0x7e0] sm:$0xff]
  %v1136 = vld [vmem:[%s5 + $0x7e8] sm:$0xff]
  %v1137 = vld [vmem:[%s5 + $0x7f0] sm:$0xff]
  %v1138 = vld [vmem:[%s5 + $0x7f8] sm:$0xff]
  %v1139 = vld [vmem:[%s6] sm:$0xf]
  %v1141 = vlaneseq
  %v1142 = vshrl.u32 %v1141, 7
  %v1143 = vsub.s32 0, %v1142
  %v1144 = vrot.slane %v1139, %v1143
  %v1145 = vlaneseq
  %v1146 = vshrl.u32 %v1145, 7
  %v1147 = vsub.s32 1, %v1146
  %v1148 = vrot.slane %v1139, %v1147
  %v1149 = vlaneseq
  %v1150 = vshrl.u32 %v1149, 7
  %v1151 = vsub.s32 2, %v1150
  %v1152 = vrot.slane %v1139, %v1151
  %v1153 = vlaneseq
  %v1154 = vshrl.u32 %v1153, 7
  %v1155 = vsub.s32 3, %v1154
  %v1156 = vrot.slane %v1139, %v1155
  %1161 = vmatprep.subr.mxu0 %v884
  %1162 = vmatpush1.msra.mxu0 %v883
  %1163 = vmatprep.subr.mxu0 %v888
  %1164 = vmatpush1.msra.mxu0 %v887
  %1165 = vmatprep.subr.mxu0 %v892
  %1166 = vmatpush1.msra.mxu0 %v891
  %1167 = vmatprep.subr.mxu0 %v896
  %1168 = vmatpush1.msra.mxu0 %v895
  %1169 = vmatprep.subr.mxu0 %v900
  %1170 = vmatpush1.msra.mxu0 %v899
  %1171 = vmatprep.subr.mxu0 %v904
  %1172 = vmatpush1.msra.mxu0 %v903
  %1173 = vmatprep.subr.mxu0 %v908
  %1174 = vmatpush1.msra.mxu0 %v907
  %1175 = vmatprep.subr.mxu0 %v912
  %1176 = vmatpush1.msra.mxu0 %v911
  %1177 = vmatprep.subr.mxu0 %v916
  %1178 = vmatpush1.msra.mxu0 %v915
  %1179 = vmatprep.subr.mxu0 %v920
  %1180 = vmatpush1.msra.mxu0 %v919
  %1181 = vmatprep.subr.mxu0 %v924
  %1182 = vmatpush1.msra.mxu0 %v923
  %1183 = vmatprep.subr.mxu0 %v928
  %1184 = vmatpush1.msra.mxu0 %v927
  %1185 = vmatprep.subr.mxu0 %v932
  %1186 = vmatpush1.msra.mxu0 %v931
  %1187 = vmatprep.subr.mxu0 %v936
  %1188 = vmatpush1.msra.mxu0 %v935
  %1189 = vmatprep.subr.mxu0 %v940
  %1190 = vmatpush1.msra.mxu0 %v939
  %1191 = vmatprep.subr.mxu0 %v944
  %1192 = vmatpush1.msra.mxu0 %v943
  %1193 = vmatprep.subr.mxu0 %v948
  %1194 = vmatpush1.msra.mxu0 %v947
  %1195 = vmatprep.subr.mxu0 %v952
  %1196 = vmatpush1.msra.mxu0 %v951
  %1197 = vmatprep.subr.mxu0 %v956
  %1198 = vmatpush1.msra.mxu0 %v955
  %1199 = vmatprep.subr.mxu0 %v960
  %1200 = vmatpush1.msra.mxu0 %v959
  %1201 = vmatprep.subr.mxu0 %v964
  %1202 = vmatpush1.msra.mxu0 %v963
  %1203 = vmatprep.subr.mxu0 %v968
  %1204 = vmatpush1.msra.mxu0 %v967
  %1205 = vmatprep.subr.mxu0 %v972
  %1206 = vmatpush1.msra.mxu0 %v971
  %1207 = vmatprep.subr.mxu0 %v976
  %1208 = vmatpush1.msra.mxu0 %v975
  %1209 = vmatprep.subr.mxu0 %v980
  %1210 = vmatpush1.msra.mxu0 %v979
  %1211 = vmatprep.subr.mxu0 %v984
  %1212 = vmatpush1.msra.mxu0 %v983
  %1213 = vmatprep.subr.mxu0 %v988
  %1214 = vmatpush1.msra.mxu0 %v987
  %1215 = vmatprep.subr.mxu0 %v992
  %1216 = vmatpush1.msra.mxu0 %v991
  %1217 = vmatprep.subr.mxu0 %v996
  %1218 = vmatpush1.msra.mxu0 %v995
  %1219 = vmatprep.subr.mxu0 %v1000
  %1220 = vmatpush1.msra.mxu0 %v999
  %1221 = vmatprep.subr.mxu0 %v1004
  %1222 = vmatpush1.msra.mxu0 %v1003
  %1223 = vmatprep.subr.mxu0 %v1008
  %1224 = vmatpush1.msra.mxu0 %v1007
  %1225 = vmatprep.mubr.f32.mxu0 %v876
  %1226 = vmatmul.mubr.f32.gmra.mrb[0].mxu0 %v875
  %v1227 = vpop.f32.mrb[0].mxu0
  %v1228 = vadd.f32 %v1144, %v1227
  %v1229 = vpop.f32.mrb[0].mxu0
  %v1230 = vadd.f32 %v1148, %v1229
  %1231 = vmatprep.mubr.f32.mxu0 %v880
  %1232 = vmatmul.mubr.f32.gmra.mrb[0].mxu0 %v879
  %v1233 = vpop.f32.mrb[0].mxu0
  %v1234 = vadd.f32 %v1144, %v1233
  %v1235 = vpop.f32.mrb[0].mxu0
  %v1236 = vadd.f32 %v1148, %v1235
  %1237 = vdwg.mxu0
  %1238 = vmatprep.subr.mxu0 %v1012
  %1239 = vmatpush1.msra.mxu0 %v1011
  %1240 = vmatprep.subr.mxu0 %v1016
  %1241 = vmatpush1.msra.mxu0 %v1015
  %1242 = vmatprep.subr.mxu0 %v1020
  %1243 = vmatpush1.msra.mxu0 %v1019
  %1244 = vmatprep.subr.mxu0 %v1024
  %1245 = vmatpush1.msra.mxu0 %v1023
  %1246 = vmatprep.subr.mxu0 %v1028
  %1247 = vmatpush1.msra.mxu0 %v1027
  %1248 = vmatprep.subr.mxu0 %v1032
  %1249 = vmatpush1.msra.mxu0 %v1031
  %1250 = vmatprep.subr.mxu0 %v1036
  %1251 = vmatpush1.msra.mxu0 %v1035
  %1252 = vmatprep.subr.mxu0 %v1040
  %1253 = vmatpush1.msra.mxu0 %v1039
  %1254 = vmatprep.subr.mxu0 %v1044
  %1255 = vmatpush1.msra.mxu0 %v1043
  %1256 = vmatprep.subr.mxu0 %v1048
  %1257 = vmatpush1.msra.mxu0 %v1047
  %1258 = vmatprep.subr.mxu0 %v1052
  %1259 = vmatpush1.msra.mxu0 %v1051
  %1260 = vmatprep.subr.mxu0 %v1056
  %1261 = vmatpush1.msra.mxu0 %v1055
  %1262 = vmatprep.subr.mxu0 %v1060
  %1263 = vmatpush1.msra.mxu0 %v1059
  %1264 = vmatprep.subr.mxu0 %v1064
  %1265 = vmatpush1.msra.mxu0 %v1063
  %1266 = vmatprep.subr.mxu0 %v1068
  %1267 = vmatpush1.msra.mxu0 %v1067
  %1268 = vmatprep.subr.mxu0 %v1072
  %1269 = vmatpush1.msra.mxu0 %v1071
  %1270 = vmatprep.subr.mxu0 %v1076
  %1271 = vmatpush1.msra.mxu0 %v1075
  %1272 = vmatprep.subr.mxu0 %v1080
  %1273 = vmatpush1.msra.mxu0 %v1079
  %1274 = vmatprep.subr.mxu0 %v1084
  %1275 = vmatpush1.msra.mxu0 %v1083
  %1276 = vmatprep.subr.mxu0 %v1088
  %1277 = vmatpush1.msra.mxu0 %v1087
  %1278 = vmatprep.subr.mxu0 %v1092
  %1279 = vmatpush1.msra.mxu0 %v1091
  %1280 = vmatprep.subr.mxu0 %v1096
  %1281 = vmatpush1.msra.mxu0 %v1095
  %1282 = vmatprep.subr.mxu0 %v1100
  %1283 = vmatpush1.msra.mxu0 %v1099
  %1284 = vmatprep.subr.mxu0 %v1104
  %1285 = vmatpush1.msra.mxu0 %v1103
  %1286 = vmatprep.subr.mxu0 %v1108
  %1287 = vmatpush1.msra.mxu0 %v1107
  %1288 = vmatprep.subr.mxu0 %v1112
  %1289 = vmatpush1.msra.mxu0 %v1111
  %1290 = vmatprep.subr.mxu0 %v1116
  %1291 = vmatpush1.msra.mxu0 %v1115
  %1292 = vmatprep.subr.mxu0 %v1120
  %1293 = vmatpush1.msra.mxu0 %v1119
  %1294 = vmatprep.subr.mxu0 %v1124
  %1295 = vmatpush1.msra.mxu0 %v1123
  %1296 = vmatprep.subr.mxu0 %v1128
  %1297 = vmatpush1.msra.mxu0 %v1127
  %1298 = vmatprep.subr.mxu0 %v1132
  %1299 = vmatpush1.msra.mxu0 %v1131
  %1300 = vmatprep.subr.mxu0 %v1136
  %1301 = vmatpush1.msra.mxu0 %v1135
  %1302 = vmatprep.mubr.f32.mxu0 %v878
  %1303 = vmatmul.mubr.f32.gmra.mrb[0].mxu0 %v877
  %v1304 = vpop.f32.mrb[0].mxu0
  %v1305 = vadd.f32 %v1228, %v1304
  %v1306 = vpop.f32.mrb[0].mxu0
  %v1307 = vadd.f32 %v1230, %v1306
  %1308 = vmatprep.mubr.f32.mxu0 %v882
  %1309 = vmatmul.mubr.f32.gmra.mrb[0].mxu0 %v881
  %v1310 = vpop.f32.mrb[0].mxu0
  %v1311 = vadd.f32 %v1234, %v1310
  %v1312 = vpop.f32.mrb[0].mxu0
  %v1313 = vadd.f32 %v1236, %v1312
  %1314 = vdwg.mxu0
  %1315 = vmatprep.subr.mxu0 %v886
  %1316 = vmatpush1.msra.mxu0 %v885
  %1317 = vmatprep.subr.mxu0 %v890
  %1318 = vmatpush1.msra.mxu0 %v889
  %1319 = vmatprep.subr.mxu0 %v894
  %1320 = vmatpush1.msra.mxu0 %v893
  %1321 = vmatprep.subr.mxu0 %v898
  %1322 = vmatpush1.msra.mxu0 %v897
  %1323 = vmatprep.subr.mxu0 %v902
  %1324 = vmatpush1.msra.mxu0 %v901
  %1325 = vmatprep.subr.mxu0 %v906
  %1326 = vmatpush1.msra.mxu0 %v905
  %1327 = vmatprep.subr.mxu0 %v910
  %1328 = vmatpush1.msra.mxu0 %v909
  %1329 = vmatprep.subr.mxu0 %v914
  %1330 = vmatpush1.msra.mxu0 %v913
  %1331 = vmatprep.subr.mxu0 %v918
  %1332 = vmatpush1.msra.mxu0 %v917
  %1333 = vmatprep.subr.mxu0 %v922
  %1334 = vmatpush1.msra.mxu0 %v921
  %1335 = vmatprep.subr.mxu0 %v926
  %1336 = vmatpush1.msra.mxu0 %v925
  %1337 = vmatprep.subr.mxu0 %v930
  %1338 = vmatpush1.msra.mxu0 %v929
  %1339 = vmatprep.subr.mxu0 %v934
  %1340 = vmatpush1.msra.mxu0 %v933
  %1341 = vmatprep.subr.mxu0 %v938
  %1342 = vmatpush1.msra.mxu0 %v937
  %1343 = vmatprep.subr.mxu0 %v942
  %1344 = vmatpush1.msra.mxu0 %v941
  %1345 = vmatprep.subr.mxu0 %v946
  %1346 = vmatpush1.msra.mxu0 %v945
  %1347 = vmatprep.subr.mxu0 %v950
  %1348 = vmatpush1.msra.mxu0 %v949
  %1349 = vmatprep.subr.mxu0 %v954
  %1350 = vmatpush1.msra.mxu0 %v953
  %1351 = vmatprep.subr.mxu0 %v958
  %1352 = vmatpush1.msra.mxu0 %v957
  %1353 = vmatprep.subr.mxu0 %v962
  %1354 = vmatpush1.msra.mxu0 %v961
  %1355 = vmatprep.subr.mxu0 %v966
  %1356 = vmatpush1.msra.mxu0 %v965
  %1357 = vmatprep.subr.mxu0 %v970
  %1358 = vmatpush1.msra.mxu0 %v969
  %1359 = vmatprep.subr.mxu0 %v974
  %1360 = vmatpush1.msra.mxu0 %v973
  %1361 = vmatprep.subr.mxu0 %v978
  %1362 = vmatpush1.msra.mxu0 %v977
  %1363 = vmatprep.subr.mxu0 %v982
  %1364 = vmatpush1.msra.mxu0 %v981
  %1365 = vmatprep.subr.mxu0 %v986
  %1366 = vmatpush1.msra.mxu0 %v985
  %1367 = vmatprep.subr.mxu0 %v990
  %1368 = vmatpush1.msra.mxu0 %v989
  %1369 = vmatprep.subr.mxu0 %v994
  %1370 = vmatpush1.msra.mxu0 %v993
  %1371 = vmatprep.subr.mxu0 %v998
  %1372 = vmatpush1.msra.mxu0 %v997
  %1373 = vmatprep.subr.mxu0 %v1002
  %1374 = vmatpush1.msra.mxu0 %v1001
  %1375 = vmatprep.subr.mxu0 %v1006
  %1376 = vmatpush1.msra.mxu0 %v1005
  %1377 = vmatprep.subr.mxu0 %v1010
  %1378 = vmatpush1.msra.mxu0 %v1009
  %1379 = vmatprep.mubr.f32.mxu0 %v876
  %1380 = vmatmul.mubr.f32.gmra.mrb[0].mxu0 %v875
  %v1381 = vpop.f32.mrb[0].mxu0
  %v1382 = vadd.f32 %v1152, %v1381
  %v1383 = vpop.f32.mrb[0].mxu0
  %v1384 = vadd.f32 %v1156, %v1383
  %1385 = vmatprep.mubr.f32.mxu0 %v880
  %1386 = vmatmul.mubr.f32.gmra.mrb[0].mxu0 %v879
  %v1387 = vpop.f32.mrb[0].mxu0
  %v1388 = vadd.f32 %v1152, %v1387
  %v1389 = vpop.f32.mrb[0].mxu0
  %v1390 = vadd.f32 %v1156, %v1389
  %1391 = vdwg.mxu0
  %1392 = vmatprep.subr.mxu0 %v1014
  %1393 = vmatpush1.msra.mxu0 %v1013
  %1394 = vmatprep.subr.mxu0 %v1018
  %1395 = vmatpush1.msra.mxu0 %v1017
  %1396 = vmatprep.subr.mxu0 %v1022
  %1397 = vmatpush1.msra.mxu0 %v1021
  %1398 = vmatprep.subr.mxu0 %v1026
  %1399 = vmatpush1.msra.mxu0 %v1025
  %1400 = vmatprep.subr.mxu0 %v1030
  %1401 = vmatpush1.msra.mxu0 %v1029
  %1402 = vmatprep.subr.mxu0 %v1034
  %1403 = vmatpush1.msra.mxu0 %v1033
  %1404 = vmatprep.subr.mxu0 %v1038
  %1405 = vmatpush1.msra.mxu0 %v1037
  %1406 = vmatprep.subr.mxu0 %v1042
  %1407 = vmatpush1.msra.mxu0 %v1041
  %1408 = vmatprep.subr.mxu0 %v1046
  %1409 = vmatpush1.msra.mxu0 %v1045
  %1410 = vmatprep.subr.mxu0 %v1050
  %1411 = vmatpush1.msra.mxu0 %v1049
  %1412 = vmatprep.subr.mxu0 %v1054
  %1413 = vmatpush1.msra.mxu0 %v1053
  %1414 = vmatprep.subr.mxu0 %v1058
  %1415 = vmatpush1.msra.mxu0 %v1057
  %1416 = vmatprep.subr.mxu0 %v1062
  %1417 = vmatpush1.msra.mxu0 %v1061
  %1418 = vmatprep.subr.mxu0 %v1066
  %1419 = vmatpush1.msra.mxu0 %v1065
  %1420 = vmatprep.subr.mxu0 %v1070
  %1421 = vmatpush1.msra.mxu0 %v1069
  %1422 = vmatprep.subr.mxu0 %v1074
  %1423 = vmatpush1.msra.mxu0 %v1073
  %1424 = vmatprep.subr.mxu0 %v1078
  %1425 = vmatpush1.msra.mxu0 %v1077
  %1426 = vmatprep.subr.mxu0 %v1082
  %1427 = vmatpush1.msra.mxu0 %v1081
  %1428 = vmatprep.subr.mxu0 %v1086
  %1429 = vmatpush1.msra.mxu0 %v1085
  %1430 = vmatprep.subr.mxu0 %v1090
  %1431 = vmatpush1.msra.mxu0 %v1089
  %1432 = vmatprep.subr.mxu0 %v1094
  %1433 = vmatpush1.msra.mxu0 %v1093
  %1434 = vmatprep.subr.mxu0 %v1098
  %1435 = vmatpush1.msra.mxu0 %v1097
  %1436 = vmatprep.subr.mxu0 %v1102
  %1437 = vmatpush1.msra.mxu0 %v1101
  %1438 = vmatprep.subr.mxu0 %v1106
  %1439 = vmatpush1.msra.mxu0 %v1105
  %1440 = vmatprep.subr.mxu0 %v1110
  %1441 = vmatpush1.msra.mxu0 %v1109
  %1442 = vmatprep.subr.mxu0 %v1114
  %1443 = vmatpush1.msra.mxu0 %v1113
  %1444 = vmatprep.subr.mxu0 %v1118
  %1445 = vmatpush1.msra.mxu0 %v1117
  %1446 = vmatprep.subr.mxu0 %v1122
  %1447 = vmatpush1.msra.mxu0 %v1121
  %1448 = vmatprep.subr.mxu0 %v1126
  %1449 = vmatpush1.msra.mxu0 %v1125
  %1450 = vmatprep.subr.mxu0 %v1130
  %1451 = vmatpush1.msra.mxu0 %v1129
  %1452 = vmatprep.subr.mxu0 %v1134
  %1453 = vmatpush1.msra.mxu0 %v1133
  %1454 = vmatprep.subr.mxu0 %v1138
  %1455 = vmatpush1.msra.mxu0 %v1137
  %1456 = vmatprep.mubr.f32.mxu0 %v878
  %1457 = vmatmul.mubr.f32.gmra.mrb[0].mxu0 %v877
  %v1458 = vpop.f32.mrb[0].mxu0
  %v1459 = vadd.f32 %v1382, %v1458
  %v1460 = vpop.f32.mrb[0].mxu0
  %v1461 = vadd.f32 %v1384, %v1460
  %1462 = vmatprep.mubr.f32.mxu0 %v882
  %1463 = vmatmul.mubr.f32.gmra.mrb[0].mxu0 %v881
  %v1464 = vpop.f32.mrb[0].mxu0
  %v1465 = vadd.f32 %v1388, %v1464
  %v1466 = vpop.f32.mrb[0].mxu0
  %v1467 = vadd.f32 %v1390, %v1466
  %1468 = vdwg.mxu0
  %v1469 = vmax.f32 %v1305, 0.0
  %v1470 = vmax.f32 %v1307, 0.0
  %v1471 = vmax.f32 %v1459, 0.0
  %v1472 = vmax.f32 %v1461, 0.0
  %v1473 = vmax.f32 %v1311, 0.0
  %v1474 = vmax.f32 %v1313, 0.0
  %v1475 = vmax.f32 %v1465, 0.0
  %v1476 = vmax.f32 %v1467, 0.0
  %1477 = vst [vmem:[#allocation2] sm:$0xff] %v1469
  %1478 = vst [vmem:[#allocation2 + $0x8] sm:$0xff] %v1470
  %1479 = vst [vmem:[#allocation2 + $0x10] sm:$0xff] %v1471
  %1480 = vst [vmem:[#allocation2 + $0x18] sm:$0xff] %v1472
  %1481 = vst [vmem:[#allocation2 + $0x20] sm:$0xff] %v1473
  %1482 = vst [vmem:[#allocation2 + $0x28] sm:$0xff] %v1474
  %1483 = vst [vmem:[#allocation2 + $0x30] sm:$0xff] %v1475
  %1484 = vst [vmem:[#allocation2 + $0x38] sm:$0xff] %v1476
  %v1485 = vld [vmem:[#allocation2] sm:$0xff]
  %v1486 = vld [vmem:[#allocation2 + $0x8] sm:$0xff]
  %v1487 = vld [vmem:[#allocation2 + $0x10] sm:$0xff]
  %v1488 = vld [vmem:[#allocation2 + $0x18] sm:$0xff]
  %v1489 = vld [vmem:[#allocation2 + $0x20] sm:$0xff]
  %v1490 = vld [vmem:[#allocation2 + $0x28] sm:$0xff]
  %v1491 = vld [vmem:[#allocation2 + $0x30] sm:$0xff]
  %v1492 = vld [vmem:[#allocation2 + $0x38] sm:$0xff]
  %v1493 = vld [vmem:[%s7] sm:$0xff]
  %v1494 = vld [vmem:[%s7 + $0x8] sm:$0xff]
  %v1495 = vld [vmem:[%s7 + $0x10] sm:$0xff]
  %v1496 = vld [vmem:[%s7 + $0x18] sm:$0xff]
  %v1497 = vld [vmem:[%s7 + $0x20] sm:$0xff]
  %v1498 = vld [vmem:[%s7 + $0x28] sm:$0xff]
  %v1499 = vld [vmem:[%s7 + $0x30] sm:$0xff]
  %v1500 = vld [vmem:[%s7 + $0x38] sm:$0xff]
  %v1501 = vld [vmem:[%s7 + $0x40] sm:$0xff]
  %v1502 = vld [vmem:[%s7 + $0x48] sm:$0xff]
  %v1503 = vld [vmem:[%s7 + $0x50] sm:$0xff]
  %v1504 = vld [vmem:[%s7 + $0x58] sm:$0xff]
  %v1505 = vld [vmem:[%s7 + $0x60] sm:$0xff]
  %v1506 = vld [vmem:[%s7 + $0x68] sm:$0xff]
  %v1507 = vld [vmem:[%s7 + $0x70] sm:$0xff]
  %v1508 = vld [vmem:[%s7 + $0x78] sm:$0xff]
  %v1509 = vld [vmem:[%s7 + $0x80] sm:$0xff]
  %v1510 = vld [vmem:[%s7 + $0x88] sm:$0xff]
  %v1511 = vld [vmem:[%s7 + $0x90] sm:$0xff]
  %v1512 = vld [vmem:[%s7 + $0x98] sm:$0xff]
  %v1513 = vld [vmem:[%s7 + $0xa0] sm:$0xff]
  %v1514 = vld [vmem:[%s7 + $0xa8] sm:$0xff]
  %v1515 = vld [vmem:[%s7 + $0xb0] sm:$0xff]
  %v1516 = vld [vmem:[%s7 + $0xb8] sm:$0xff]
  %v1517 = vld [vmem:[%s7 + $0xc0] sm:$0xff]
  %v1518 = vld [vmem:[%s7 + $0xc8] sm:$0xff]
  %v1519 = vld [vmem:[%s7 + $0xd0] sm:$0xff]
  %v1520 = vld [vmem:[%s7 + $0xd8] sm:$0xff]
  %v1521 = vld [vmem:[%s7 + $0xe0] sm:$0xff]
  %v1522 = vld [vmem:[%s7 + $0xe8] sm:$0xff]
  %v1523 = vld [vmem:[%s7 + $0xf0] sm:$0xff]
  %v1524 = vld [vmem:[%s7 + $0xf8] sm:$0xff]
  %v1525 = vld [vmem:[%s7 + $0x100] sm:$0xff]
  %v1526 = vld [vmem:[%s7 + $0x108] sm:$0xff]
  %v1527 = vld [vmem:[%s7 + $0x110] sm:$0xff]
  %v1528 = vld [vmem:[%s7 + $0x118] sm:$0xff]
  %v1529 = vld [vmem:[%s7 + $0x120] sm:$0xff]
  %v1530 = vld [vmem:[%s7 + $0x128] sm:$0xff]
  %v1531 = vld [vmem:[%s7 + $0x130] sm:$0xff]
  %v1532 = vld [vmem:[%s7 + $0x138] sm:$0xff]
  %v1533 = vld [vmem:[%s7 + $0x140] sm:$0xff]
  %v1534 = vld [vmem:[%s7 + $0x148] sm:$0xff]
  %v1535 = vld [vmem:[%s7 + $0x150] sm:$0xff]
  %v1536 = vld [vmem:[%s7 + $0x158] sm:$0xff]
  %v1537 = vld [vmem:[%s7 + $0x160] sm:$0xff]
  %v1538 = vld [vmem:[%s7 + $0x168] sm:$0xff]
  %v1539 = vld [vmem:[%s7 + $0x170] sm:$0xff]
  %v1540 = vld [vmem:[%s7 + $0x178] sm:$0xff]
  %v1541 = vld [vmem:[%s7 + $0x180] sm:$0xff]
  %v1542 = vld [vmem:[%s7 + $0x188] sm:$0xff]
  %v1543 = vld [vmem:[%s7 + $0x190] sm:$0xff]
  %v1544 = vld [vmem:[%s7 + $0x198] sm:$0xff]
  %v1545 = vld [vmem:[%s7 + $0x1a0] sm:$0xff]
  %v1546 = vld [vmem:[%s7 + $0x1a8] sm:$0xff]
  %v1547 = vld [vmem:[%s7 + $0x1b0] sm:$0xff]
  %v1548 = vld [vmem:[%s7 + $0x1b8] sm:$0xff]
  %v1549 = vld [vmem:[%s7 + $0x1c0] sm:$0xff]
  %v1550 = vld [vmem:[%s7 + $0x1c8] sm:$0xff]
  %v1551 = vld [vmem:[%s7 + $0x1d0] sm:$0xff]
  %v1552 = vld [vmem:[%s7 + $0x1d8] sm:$0xff]
  %v1553 = vld [vmem:[%s7 + $0x1e0] sm:$0xff]
  %v1554 = vld [vmem:[%s7 + $0x1e8] sm:$0xff]
  %v1555 = vld [vmem:[%s7 + $0x1f0] sm:$0xff]
  %v1556 = vld [vmem:[%s7 + $0x1f8] sm:$0xff]
  %v1557 = vld [vmem:[%s8] sm:$0x1]
  %v1559 = vlaneseq
  %v1560 = vshrl.u32 %v1559, 7
  %v1561 = vsub.s32 0, %v1560
  %v1562 = vrot.slane %v1557, %v1561
  %1564 = vmatprep.subr.mxu0 0.0
  %1565 = vmatpush1.msra.mxu0 %v1493
  %1566 = vmatprep.subr.mxu0 0.0
  %1567 = vmatpush1.msra.mxu0 %v1494
  %1568 = vmatprep.subr.mxu0 0.0
  %1569 = vmatpush1.msra.mxu0 %v1495
  %1570 = vmatprep.subr.mxu0 0.0
  %1571 = vmatpush1.msra.mxu0 %v1496
  %1572 = vmatprep.subr.mxu0 0.0
  %1573 = vmatpush1.msra.mxu0 %v1497
  %1574 = vmatprep.subr.mxu0 0.0
  %1575 = vmatpush1.msra.mxu0 %v1498
  %1576 = vmatprep.subr.mxu0 0.0
  %1577 = vmatpush1.msra.mxu0 %v1499
  %1578 = vmatprep.subr.mxu0 0.0
  %1579 = vmatpush1.msra.mxu0 %v1500
  %1580 = vmatprep.subr.mxu0 0.0
  %1581 = vmatpush1.msra.mxu0 %v1501
  %1582 = vmatprep.subr.mxu0 0.0
  %1583 = vmatpush1.msra.mxu0 %v1502
  %1584 = vmatprep.subr.mxu0 0.0
  %1585 = vmatpush1.msra.mxu0 %v1503
  %1586 = vmatprep.subr.mxu0 0.0
  %1587 = vmatpush1.msra.mxu0 %v1504
  %1588 = vmatprep.subr.mxu0 0.0
  %1589 = vmatpush1.msra.mxu0 %v1505
  %1590 = vmatprep.subr.mxu0 0.0
  %1591 = vmatpush1.msra.mxu0 %v1506
  %1592 = vmatprep.subr.mxu0 0.0
  %1593 = vmatpush1.msra.mxu0 %v1507
  %1594 = vmatprep.subr.mxu0 0.0
  %1595 = vmatpush1.msra.mxu0 %v1508
  %1596 = vmatprep.subr.mxu0 0.0
  %1597 = vmatpush1.msra.mxu0 %v1509
  %1598 = vmatprep.subr.mxu0 0.0
  %1599 = vmatpush1.msra.mxu0 %v1510
  %1600 = vmatprep.subr.mxu0 0.0
  %1601 = vmatpush1.msra.mxu0 %v1511
  %1602 = vmatprep.subr.mxu0 0.0
  %1603 = vmatpush1.msra.mxu0 %v1512
  %1604 = vmatprep.subr.mxu0 0.0
  %1605 = vmatpush1.msra.mxu0 %v1513
  %1606 = vmatprep.subr.mxu0 0.0
  %1607 = vmatpush1.msra.mxu0 %v1514
  %1608 = vmatprep.subr.mxu0 0.0
  %1609 = vmatpush1.msra.mxu0 %v1515
  %1610 = vmatprep.subr.mxu0 0.0
  %1611 = vmatpush1.msra.mxu0 %v1516
  %1612 = vmatprep.subr.mxu0 0.0
  %1613 = vmatpush1.msra.mxu0 %v1517
  %1614 = vmatprep.subr.mxu0 0.0
  %1615 = vmatpush1.msra.mxu0 %v1518
  %1616 = vmatprep.subr.mxu0 0.0
  %1617 = vmatpush1.msra.mxu0 %v1519
  %1618 = vmatprep.subr.mxu0 0.0
  %1619 = vmatpush1.msra.mxu0 %v1520
  %1620 = vmatprep.subr.mxu0 0.0
  %1621 = vmatpush1.msra.mxu0 %v1521
  %1622 = vmatprep.subr.mxu0 0.0
  %1623 = vmatpush1.msra.mxu0 %v1522
  %1624 = vmatprep.subr.mxu0 0.0
  %1625 = vmatpush1.msra.mxu0 %v1523
  %1626 = vmatprep.subr.mxu0 0.0
  %1627 = vmatpush1.msra.mxu0 %v1524
  %1628 = vmatprep.mubr.f32.mxu0 %v1486
  %1629 = vmatmul.mubr.f32.gmra.mrb[0].mxu0 %v1485
  %v1630 = vpop.f32.mrb[0].mxu0
  %v1631 = vadd.f32 %v1562, %v1630
  %v1632 = vpop.f32.mrb[0].mxu0
  %1633 = vmatprep.mubr.f32.mxu0 %v1490
  %1634 = vmatmul.mubr.f32.gmra.mrb[0].mxu0 %v1489
  %v1635 = vpop.f32.mrb[0].mxu0
  %v1636 = vadd.f32 %v1562, %v1635
  %v1637 = vpop.f32.mrb[0].mxu0
  %1638 = vdwg.mxu0
  %1639 = vmatprep.subr.mxu0 0.0
  %1640 = vmatpush1.msra.mxu0 %v1525
  %1641 = vmatprep.subr.mxu0 0.0
  %1642 = vmatpush1.msra.mxu0 %v1526
  %1643 = vmatprep.subr.mxu0 0.0
  %1644 = vmatpush1.msra.mxu0 %v1527
  %1645 = vmatprep.subr.mxu0 0.0
  %1646 = vmatpush1.msra.mxu0 %v1528
  %1647 = vmatprep.subr.mxu0 0.0
  %1648 = vmatpush1.msra.mxu0 %v1529
  %1649 = vmatprep.subr.mxu0 0.0
  %1650 = vmatpush1.msra.mxu0 %v1530
  %1651 = vmatprep.subr.mxu0 0.0
  %1652 = vmatpush1.msra.mxu0 %v1531
  %1653 = vmatprep.subr.mxu0 0.0
  %1654 = vmatpush1.msra.mxu0 %v1532
  %1655 = vmatprep.subr.mxu0 0.0
  %1656 = vmatpush1.msra.mxu0 %v1533
  %1657 = vmatprep.subr.mxu0 0.0
  %1658 = vmatpush1.msra.mxu0 %v1534
  %1659 = vmatprep.subr.mxu0 0.0
  %1660 = vmatpush1.msra.mxu0 %v1535
  %1661 = vmatprep.subr.mxu0 0.0
  %1662 = vmatpush1.msra.mxu0 %v1536
  %1663 = vmatprep.subr.mxu0 0.0
  %1664 = vmatpush1.msra.mxu0 %v1537
  %1665 = vmatprep.subr.mxu0 0.0
  %1666 = vmatpush1.msra.mxu0 %v1538
  %1667 = vmatprep.subr.mxu0 0.0
  %1668 = vmatpush1.msra.mxu0 %v1539
  %1669 = vmatprep.subr.mxu0 0.0
  %1670 = vmatpush1.msra.mxu0 %v1540
  %1671 = vmatprep.subr.mxu0 0.0
  %1672 = vmatpush1.msra.mxu0 %v1541
  %1673 = vmatprep.subr.mxu0 0.0
  %1674 = vmatpush1.msra.mxu0 %v1542
  %1675 = vmatprep.subr.mxu0 0.0
  %1676 = vmatpush1.msra.mxu0 %v1543
  %1677 = vmatprep.subr.mxu0 0.0
  %1678 = vmatpush1.msra.mxu0 %v1544
  %1679 = vmatprep.subr.mxu0 0.0
  %1680 = vmatpush1.msra.mxu0 %v1545
  %1681 = vmatprep.subr.mxu0 0.0
  %1682 = vmatpush1.msra.mxu0 %v1546
  %1683 = vmatprep.subr.mxu0 0.0
  %1684 = vmatpush1.msra.mxu0 %v1547
  %1685 = vmatprep.subr.mxu0 0.0
  %1686 = vmatpush1.msra.mxu0 %v1548
  %1687 = vmatprep.subr.mxu0 0.0
  %1688 = vmatpush1.msra.mxu0 %v1549
  %1689 = vmatprep.subr.mxu0 0.0
  %1690 = vmatpush1.msra.mxu0 %v1550
  %1691 = vmatprep.subr.mxu0 0.0
  %1692 = vmatpush1.msra.mxu0 %v1551
  %1693 = vmatprep.subr.mxu0 0.0
  %1694 = vmatpush1.msra.mxu0 %v1552
  %1695 = vmatprep.subr.mxu0 0.0
  %1696 = vmatpush1.msra.mxu0 %v1553
  %1697 = vmatprep.subr.mxu0 0.0
  %1698 = vmatpush1.msra.mxu0 %v1554
  %1699 = vmatprep.subr.mxu0 0.0
  %1700 = vmatpush1.msra.mxu0 %v1555
  %1701 = vmatprep.subr.mxu0 0.0
  %1702 = vmatpush1.msra.mxu0 %v1556
  %1703 = vmatprep.mubr.f32.mxu0 %v1488
  %1704 = vmatmul.mubr.f32.gmra.mrb[0].mxu0 %v1487
  %v1705 = vpop.f32.mrb[0].mxu0
  %v1706 = vadd.f32 %v1631, %v1705
  %v1707 = vpop.f32.mrb[0].mxu0
  %1708 = vmatprep.mubr.f32.mxu0 %v1492
  %1709 = vmatmul.mubr.f32.gmra.mrb[0].mxu0 %v1491
  %v1710 = vpop.f32.mrb[0].mxu0
  %v1711 = vadd.f32 %v1636, %v1710
  %v1712 = vpop.f32.mrb[0].mxu0
  %1713 = vdwg.mxu0
  %1714 = vst [vmem:[%s9] sm:$0xff] %v1706
  %1715 = vst [vmem:[%s9 + $0x8] sm:$0xff] %v1711
  // Predicated region
  $region38: #{base_encoder_t_forward.1} parent=0 // pred_check
    _
  $region39: #{base_encoder_t_forward.1} parent=0 // pred_check_branch
    %1717 = sbr.rel (0) target = $region41
  $region40: #{base_encoder_t_forward.1} parent=0 // pred_region
    _
  $region41: #{base_encoder_t_forward.1} parent=0 // pred_fallthru
    _
  // Predicated region
  $region42: #{base_encoder_t_forward.1} parent=0 // pred_check
    _
  $region43: #{base_encoder_t_forward.1} parent=0 // pred_check_branch
    %1719 = sbr.rel (0) target = $region45
  $region44: #{base_encoder_t_forward.1} parent=0 // pred_region
    _
  $region45: #{base_encoder_t_forward.1} parent=0 // pred_fallthru
    _

</llo_original>
